<compile_context>
chip_gen: v5e
topology: v5e:2x2
jax: 0.10.0
libtpu: 0.0.40
codegen_flags: <defaults>
</compile_context>

<pallas_src>
import jax
import jax.numpy as jnp
import numpy as np
from jax.experimental import pallas as pl
from jax.experimental.pallas import tpu as pltpu


# -----------------------------------------------------------------------------
# One-time parameter re-layout (host side, hoisted off the forward path)
# -----------------------------------------------------------------------------
def _banded_conv_weight(conv_w, w_in):
    """PyTorch OIHW 3x3 conv weight -> (3, (w_in+2)*Cin, w_in*Cout) banded
    matmul weights, one per row shift dy.

    Row index    : xin * Cin + ci   (padded-input column, channel-interleaved)
    Column index : (x % 2) * (w_in//2 * Cout) + (x // 2) * Cout + co
                   (even output columns in the first lane half, odd in the
                   second, so the 2-wide W max-pool is a contiguous half max).
    """
    cw = np.asarray(conv_w, np.float32)
    cout, cin = cw.shape[0], cw.shape[1]
    half = (w_in // 2) * cout
    banded = np.zeros((3, (w_in + 2) * cin, w_in * cout), np.float32)
    for dy in range(3):
        for dx in range(3):
            blk = cw[:, :, dy, dx].T                       # (cin, cout)
            for x in range(w_in):
                col = (x % 2) * half + (x // 2) * cout
                row = (x + dx) * cin
                banded[dy, row:row + cin, col:col + cout] = blk
    return jnp.asarray(banded)


def prepare_params(cw1, cb1, cw2, cb2, fw1, fb1, fw2, fb2, H, W):
    C1 = cw1.shape[0]
    C2 = cw2.shape[0]
    Hd, O = fw1.shape[0], fw2.shape[0]
    W2, H4, W4 = W // 2, H // 4, W // 4
    w1b = _banded_conv_weight(cw1, W)            # (3, (W+2)*Cin,  W*C1)
    w2b = _banded_conv_weight(cw2, W2)           # (3, (W2+2)*C1, W2*C2)
    b1t = jnp.tile(cb1, W).reshape(1, W * C1)    # bias per (x, c) lane
    b2t = jnp.tile(cb2, W2).reshape(1, W2 * C2)
    # PyTorch flattens NCHW; the kernel produces NHWC (h4, w4, c) features,
    # so permute fc1's columns once here.
    fw1p = jnp.transpose(fw1.reshape(Hd, C2, H4, W4),
                         (0, 2, 3, 1)).reshape(Hd, -1).T   # (F, Hd)
    return (w1b, b1t, w2b, b2t, fw1p,
            fb1.reshape(1, Hd), jnp.transpose(fw2), fb2.reshape(1, O))


# -----------------------------------------------------------------------------
# Forward pass: one fused pallas_call, batch sharded over a parallel grid axis
# -----------------------------------------------------------------------------
@jax.jit
def net_forward(x_nchw, w1b, b1t, w2b, b2t, fw1p, fb1r, fw2t, fb2r):
    B, Cin, H, W = x_nchw.shape
    assert H % 4 == 0 and W % 4 == 0, "kernel assumes H, W divisible by 4"
    H2, W2, H4, W4 = H // 2, W // 2, H // 4, W // 4
    C1 = b1t.shape[-1] // W
    C2 = b2t.shape[-1] // W2
    Hd = fb1r.shape[-1]
    O = fb2r.shape[-1]
    half1 = W2 * C1            # 128 at the test shapes (lane-dense)
    half2 = W4 * C2            # 32
    F = H4 * W4 * C2
    f32 = jnp.float32

    # NCHW -> per-image lane-dense rows (H, W*Cin)
    x = jnp.transpose(x_nchw, (0, 2, 3, 1)).reshape(B, H, W * Cin).astype(f32)

    def kernel(x_ref, w1_ref, b1_ref, w2_ref, b2_ref,
               fw1_ref, fb1_ref, fw2_ref, fb2_ref, o_ref,
               xp1_ref, m1_ref, xp2_ref, m2_ref):
        # ---------------- conv1: zero halo only, store interior once ---------
        xp1_ref[0:1, :] = jnp.zeros((1, (W + 2) * Cin), f32)
        xp1_ref[H + 1:H + 2, :] = jnp.zeros((1, (W + 2) * Cin), f32)
        xp1_ref[:, 0:Cin] = jnp.zeros((H + 2, Cin), f32)
        xp1_ref[:, (W + 1) * Cin:(W + 2) * Cin] = jnp.zeros((H + 2, Cin), f32)
        xp1_ref[pl.ds(1, H), pl.ds(Cin, W * Cin)] = x_ref[0]

        # conv1 == 3 row-shifted banded matmuls (pad + 3x3 folded into weights)
        acc = jnp.dot(xp1_ref[pl.ds(0, H), :], w1_ref[0],
                      preferred_element_type=f32)
        acc += jnp.dot(xp1_ref[pl.ds(1, H), :], w1_ref[1],
                       preferred_element_type=f32)
        acc += jnp.dot(xp1_ref[pl.ds(2, H), :], w1_ref[2],
                       preferred_element_type=f32)
        a1 = jnp.tanh(acc + b1_ref[...])                  # (H, W*C1) lane-dense

        # 2x2 max pool: W -> contiguous half-lane max (parity column order),
        #               H -> stride-2 sublane reads of a tiny VMEM scratch.
        m1_ref[...] = jnp.maximum(a1[:, :half1], a1[:, half1:])
        p1 = jnp.maximum(m1_ref[pl.ds(0, H2, 2), :],
                         m1_ref[pl.ds(1, H2, 2), :])      # (H2, W2*C1)

        # ---------------- conv2 ----------------------------------------------
        xp2_ref[0:1, :] = jnp.zeros((1, (W2 + 2) * C1), f32)
        xp2_ref[H2 + 1:H2 + 2, :] = jnp.zeros((1, (W2 + 2) * C1), f32)
        xp2_ref[:, 0:C1] = jnp.zeros((H2 + 2, C1), f32)
        xp2_ref[:, (W2 + 1) * C1:(W2 + 2) * C1] = jnp.zeros((H2 + 2, C1), f32)
        xp2_ref[pl.ds(1, H2), pl.ds(C1, W2 * C1)] = p1

        acc2 = jnp.dot(xp2_ref[pl.ds(0, H2), :], w2_ref[0],
                       preferred_element_type=f32)
        acc2 += jnp.dot(xp2_ref[pl.ds(1, H2), :], w2_ref[1],
                        preferred_element_type=f32)
        acc2 += jnp.dot(xp2_ref[pl.ds(2, H2), :], w2_ref[2],
                        preferred_element_type=f32)
        a2 = jnp.tanh(acc2 + b2_ref[...])                 # (H2, W2*C2)

        m2_ref[...] = jnp.maximum(a2[:, :half2], a2[:, half2:])
        p2 = jnp.maximum(m2_ref[pl.ds(0, H4, 2), :],
                         m2_ref[pl.ds(1, H4, 2), :])      # (H4, W4*C2)

        # ---- flatten folded into fc1: contract pooled rows directly ---------
        # (fc1 weight rows were pre-permuted to the kernel's NHWC order)
        hid = fb1_ref[...]
        for h4 in range(H4):
            hid = hid + jnp.dot(p2[h4:h4 + 1, :],
                                fw1_ref[pl.ds(h4 * half2, half2), :],
                                preferred_element_type=f32)
        hid = jnp.tanh(hid)
        out = (jnp.dot(hid, fw2_ref[...], preferred_element_type=f32)
               + fb2_ref[...])
        o_ref[0] = out.astype(o_ref.dtype)

    out = pl.pallas_call(
        kernel,
        out_shape=jax.ShapeDtypeStruct((B, 1, O), f32),
        grid=(B,),
        in_specs=[
            pl.BlockSpec((1, H, W * Cin), lambda b: (b, 0, 0)),
            pl.BlockSpec((3, (W + 2) * Cin, W * C1), lambda b: (0, 0, 0)),
            pl.BlockSpec((1, W * C1), lambda b: (0, 0)),
            pl.BlockSpec((3, (W2 + 2) * C1, W2 * C2), lambda b: (0, 0, 0)),
            pl.BlockSpec((1, W2 * C2), lambda b: (0, 0)),
            pl.BlockSpec((F, Hd), lambda b: (0, 0)),
            pl.BlockSpec((1, Hd), lambda b: (0, 0)),
            pl.BlockSpec((Hd, O), lambda b: (0, 0)),
            pl.BlockSpec((1, O), lambda b: (0, 0)),
        ],
        out_specs=pl.BlockSpec((1, 1, O), lambda b: (b, 0, 0)),
        scratch_shapes=[
            pltpu.VMEM((H + 2, (W + 2) * Cin), f32),      # padded conv1 input
            pltpu.VMEM((H, half1), f32),                  # W-pooled conv1 map
            pltpu.VMEM((H2 + 2, (W2 + 2) * C1), f32),     # padded conv2 input
            pltpu.VMEM((H2, half2), f32),                 # W-pooled conv2 map
        ],
        compiler_params=pltpu.CompilerParams(
            dimension_semantics=("parallel",)),           # 2 TCs on v7x
    )(x, w1b, b1t, w2b, b2t, fw1p, fb1r, fw2t, fb2r)
    return out[:, 0, :]


# -----------------------------------------------------------------------------
# Pure-JAX reference (for correctness check)
# -----------------------------------------------------------------------------
def reference_forward(x_nchw, cw1, cb1, cw2, cb2, fw1, fb1, fw2, fb2):
    dn = ("NHWC", "HWIO", "NHWC")

    def conv_tanh(x, w, b):
        w_hwio = jnp.transpose(w, (2, 3, 1, 0))
        y = jax.lax.conv_general_dilated(x, w_hwio, (1, 1), "SAME",
                                         dimension_numbers=dn)
        return jnp.tanh(y + b)

    def pool(x):
        return jax.lax.reduce_window(x, -jnp.inf, jax.lax.max,
                                     (1, 2, 2, 1), (1, 2, 2, 1), "VALID")

    x = jnp.transpose(x_nchw, (0, 2, 3, 1))
    y = pool(conv_tanh(x, cw1, cb1))
    y = pool(conv_tanh(y, cw2, cb2))
    feat = jnp.transpose(y, (0, 3, 1, 2)).reshape(y.shape[0], -1)   # NCHW flatten
    h = jnp.tanh(feat @ fw1.T + fb1)
    return h @ fw2.T + fb2


if __name__ == "__main__":
    B, C, H, W = 2, 4, 16, 16
    hidden_units, output_units = 32, 10
    conv1_out, conv2_out = 16, 8
    fc1_in = (W // 4) * (H // 4) * conv2_out                        # 4*4*8 = 128

    ks = jax.random.split(jax.random.PRNGKey(0), 9)
    x   = jax.random.normal(ks[0], (B, C, H, W), jnp.float32)
    cw1 = jax.random.normal(ks[1], (conv1_out, C, 3, 3), jnp.float32) * 0.1
    cb1 = jax.random.normal(ks[2], (conv1_out,), jnp.float32) * 0.1
    cw2 = jax.random.normal(ks[3], (conv2_out, conv1_out, 3, 3), jnp.float32) * 0.1
    cb2 = jax.random.normal(ks[4], (conv2_out,), jnp.float32) * 0.1
    fw1 = jax.random.normal(ks[5], (hidden_units, fc1_in), jnp.float32) * 0.1
    fb1 = jax.random.normal(ks[6], (hidden_units,), jnp.float32) * 0.1
    fw2 = jax.random.normal(ks[7], (output_units, hidden_units), jnp.float32) * 0.1
    fb2 = jax.random.normal(ks[8], (output_units,), jnp.float32) * 0.1

    # one-time weight re-layout (hoisted off the per-forward critical path)
    params = prepare_params(cw1, cb1, cw2, cb2, fw1, fb1, fw2, fb2, H, W)

    out = jax.block_until_ready(net_forward(x, *params))

    ref = reference_forward(x, cw1, cb1, cw2, cb2, fw1, fb1, fw2, fb2)
    assert out.shape == (B, output_units), out.shape
    err = jnp.max(jnp.abs(out - ref))
    assert jnp.allclose(out, ref, atol=1e-4, rtol=1e-4), f"max abs err {err}"
    print("KERNEL_OK")
</pallas_src>

<mosaic_0001>
module attributes {stable_mosaic.version = 11 : i64} {
  func.func @kernel(%arg0: i32, %arg1: memref<1x16x64xf32, #tpu.memory_space<vmem>>, %arg2: memref<3x72x256xf32, #tpu.memory_space<vmem>>, %arg3: memref<1x256xf32, #tpu.memory_space<vmem>>, %arg4: memref<3x160x64xf32, #tpu.memory_space<vmem>>, %arg5: memref<1x64xf32, #tpu.memory_space<vmem>>, %arg6: memref<128x32xf32, #tpu.memory_space<vmem>>, %arg7: memref<1x32xf32, #tpu.memory_space<vmem>>, %arg8: memref<32x10xf32, #tpu.memory_space<vmem>>, %arg9: memref<1x10xf32, #tpu.memory_space<vmem>>, %arg10: memref<1x1x10xf32, #tpu.memory_space<vmem>>, %arg11: memref<18x72xf32, #tpu.memory_space<vmem>>, %arg12: memref<16x128xf32, #tpu.memory_space<vmem>>, %arg13: memref<10x160xf32, #tpu.memory_space<vmem>>, %arg14: memref<8x32xf32, #tpu.memory_space<vmem>>) attributes {dimension_semantics = [#tpu.dimension_semantics<parallel>], iteration_bounds = array<i64: 2>, scalar_prefetch = 0 : i64, scratch_operands = 4 : i64, tpu.core_type = #tpu.core_type<tc>, window_params = [{transform_indices = @transform_0, window_bounds = array<i64: 1, 16, 64>}, {pipeline_mode = #tpu.pipeline_mode<synchronous>, transform_indices = @transform_1, window_bounds = array<i64: 3, 72, 256>}, {pipeline_mode = #tpu.pipeline_mode<synchronous>, transform_indices = @transform_2, window_bounds = array<i64: 1, 256>}, {pipeline_mode = #tpu.pipeline_mode<synchronous>, transform_indices = @transform_3, window_bounds = array<i64: 3, 160, 64>}, {pipeline_mode = #tpu.pipeline_mode<synchronous>, transform_indices = @transform_4, window_bounds = array<i64: 1, 64>}, {pipeline_mode = #tpu.pipeline_mode<synchronous>, transform_indices = @transform_5, window_bounds = array<i64: 128, 32>}, {pipeline_mode = #tpu.pipeline_mode<synchronous>, transform_indices = @transform_6, window_bounds = array<i64: 1, 32>}, {pipeline_mode = #tpu.pipeline_mode<synchronous>, transform_indices = @transform_7, window_bounds = array<i64: 32, 10>}, {pipeline_mode = #tpu.pipeline_mode<synchronous>, transform_indices = @transform_8, window_bounds = array<i64: 1, 10>}, {transform_indices = @transform_9, window_bounds = array<i64: 1, 1, 10>}]} {
    %cst = arith.constant 0.000000e+00 : f32
    %0 = vector.broadcast %cst : f32 to vector<1x72xf32>
    %c0 = arith.constant 0 : index
    %c0_0 = arith.constant 0 : index
    %1 = vector.load %arg11[%c0, %c0_0] : memref<18x72xf32, #tpu.memory_space<vmem>>, vector<1x72xf32>
    tpu.vector_store %arg11[%c0, %c0_0], %0 {strides = array<i32>} : memref<18x72xf32, #tpu.memory_space<vmem>>, vector<1x72xf32>,
    %cst_1 = arith.constant 0.000000e+00 : f32
    %2 = vector.broadcast %cst_1 : f32 to vector<1x72xf32>
    %c17 = arith.constant 17 : index
    %c0_2 = arith.constant 0 : index
    %3 = vector.load %arg11[%c17, %c0_2] : memref<18x72xf32, #tpu.memory_space<vmem>>, vector<1x72xf32>
    tpu.vector_store %arg11[%c17, %c0_2], %2 {strides = array<i32>} : memref<18x72xf32, #tpu.memory_space<vmem>>, vector<1x72xf32>,
    %cst_3 = arith.constant 0.000000e+00 : f32
    %4 = vector.broadcast %cst_3 : f32 to vector<18x4xf32>
    %c0_4 = arith.constant 0 : index
    %c0_5 = arith.constant 0 : index
    %5 = vector.load %arg11[%c0_4, %c0_5] : memref<18x72xf32, #tpu.memory_space<vmem>>, vector<18x4xf32>
    tpu.vector_store %arg11[%c0_4, %c0_5], %4 {strides = array<i32>} : memref<18x72xf32, #tpu.memory_space<vmem>>, vector<18x4xf32>,
    %cst_6 = arith.constant 0.000000e+00 : f32
    %6 = vector.broadcast %cst_6 : f32 to vector<18x4xf32>
    %c0_7 = arith.constant 0 : index
    %c68 = arith.constant 68 : index
    %7 = vector.load %arg11[%c0_7, %c68] : memref<18x72xf32, #tpu.memory_space<vmem>>, vector<18x4xf32>
    tpu.vector_store %arg11[%c0_7, %c68], %6 {strides = array<i32>} : memref<18x72xf32, #tpu.memory_space<vmem>>, vector<18x4xf32>,
    %c0_8 = arith.constant 0 : index
    %c0_9 = arith.constant 0 : index
    %c0_10 = arith.constant 0 : index
    %8 = vector.load %arg1[%c0_8, %c0_9, %c0_10] : memref<1x16x64xf32, #tpu.memory_space<vmem>>, vector<1x16x64xf32>
    %9 = vector.shape_cast %8 : vector<1x16x64xf32> to vector<16x64xf32>
    %c1 = arith.constant 1 : index
    %c4 = arith.constant 4 : index
    %10 = vector.load %arg11[%c1, %c4] : memref<18x72xf32, #tpu.memory_space<vmem>>, vector<16x64xf32>
    tpu.vector_store %arg11[%c1, %c4], %9 {strides = array<i32>} : memref<18x72xf32, #tpu.memory_space<vmem>>, vector<16x64xf32>,
    %c0_11 = arith.constant 0 : index
    %c0_12 = arith.constant 0 : index
    %11 = vector.load %arg11[%c0_11, %c0_12] : memref<18x72xf32, #tpu.memory_space<vmem>>, vector<16x72xf32>
    %c0_13 = arith.constant 0 : index
    %c0_14 = arith.constant 0 : index
    %c0_15 = arith.constant 0 : index
    %12 = vector.load %arg2[%c0_13, %c0_14, %c0_15] : memref<3x72x256xf32, #tpu.memory_space<vmem>>, vector<1x72x256xf32>
    %13 = vector.shape_cast %12 : vector<1x72x256xf32> to vector<72x256xf32>
    %cst_16 = arith.constant dense<0.000000e+00> : vector<16x256xf32>
    %14 = tpu.matmul %11, %13, %cst_16 {dimension_numbers = #tpu.dot_dimension_numbers<[1], [0], [0], [1], [0, 0, 1, 1], [], []>} : vector<16x72xf32>, vector<72x256xf32>, vector<16x256xf32> -> vector<16x256xf32>
    %c1_17 = arith.constant 1 : index
    %c0_18 = arith.constant 0 : index
    %15 = vector.load %arg11[%c1_17, %c0_18] : memref<18x72xf32, #tpu.memory_space<vmem>>, vector<16x72xf32>
    %c1_19 = arith.constant 1 : index
    %c0_20 = arith.constant 0 : index
    %c0_21 = arith.constant 0 : index
    %16 = vector.load %arg2[%c1_19, %c0_20, %c0_21] : memref<3x72x256xf32, #tpu.memory_space<vmem>>, vector<1x72x256xf32>
    %17 = vector.shape_cast %16 : vector<1x72x256xf32> to vector<72x256xf32>
    %cst_22 = arith.constant dense<0.000000e+00> : vector<16x256xf32>
    %18 = tpu.matmul %15, %17, %cst_22 {dimension_numbers = #tpu.dot_dimension_numbers<[1], [0], [0], [1], [0, 0, 1, 1], [], []>} : vector<16x72xf32>, vector<72x256xf32>, vector<16x256xf32> -> vector<16x256xf32>
    %19 = arith.addf %14, %18 : vector<16x256xf32>
    %c2 = arith.constant 2 : index
    %c0_23 = arith.constant 0 : index
    %20 = vector.load %arg11[%c2, %c0_23] : memref<18x72xf32, #tpu.memory_space<vmem>>, vector<16x72xf32>
    %c2_24 = arith.constant 2 : index
    %c0_25 = arith.constant 0 : index
    %c0_26 = arith.constant 0 : index
    %21 = vector.load %arg2[%c2_24, %c0_25, %c0_26] : memref<3x72x256xf32, #tpu.memory_space<vmem>>, vector<1x72x256xf32>
    %22 = vector.shape_cast %21 : vector<1x72x256xf32> to vector<72x256xf32>
    %cst_27 = arith.constant dense<0.000000e+00> : vector<16x256xf32>
    %23 = tpu.matmul %20, %22, %cst_27 {dimension_numbers = #tpu.dot_dimension_numbers<[1], [0], [0], [1], [0, 0, 1, 1], [], []>} : vector<16x72xf32>, vector<72x256xf32>, vector<16x256xf32> -> vector<16x256xf32>
    %24 = arith.addf %19, %23 : vector<16x256xf32>
    %c0_28 = arith.constant 0 : index
    %c0_29 = arith.constant 0 : index
    %25 = vector.load %arg3[%c0_28, %c0_29] : memref<1x256xf32, #tpu.memory_space<vmem>>, vector<1x256xf32>
    %26 = vector.broadcast %25 : vector<1x256xf32> to vector<16x256xf32>
    %27 = arith.addf %24, %26 : vector<16x256xf32>
    %28 = math.tanh %27 : vector<16x256xf32>
    %29 = vector.extract_strided_slice %28 {offsets = [0, 0], sizes = [16, 128], strides = [1, 1]} : vector<16x256xf32> to vector<16x128xf32>
    %30 = vector.extract_strided_slice %28 {offsets = [0, 128], sizes = [16, 128], strides = [1, 1]} : vector<16x256xf32> to vector<16x128xf32>
    %31 = arith.maximumf %29, %30 : vector<16x128xf32>
    %c0_30 = arith.constant 0 : index
    %c0_31 = arith.constant 0 : index
    %32 = vector.load %arg12[%c0_30, %c0_31] : memref<16x128xf32, #tpu.memory_space<vmem>>, vector<16x128xf32>
    tpu.vector_store %arg12[%c0_30, %c0_31], %31 {strides = array<i32>} : memref<16x128xf32, #tpu.memory_space<vmem>>, vector<16x128xf32>,
    %c0_32 = arith.constant 0 : index
    %c0_33 = arith.constant 0 : index
    %33 = tpu.strided_load %arg12[%c0_32, %c0_33] {strides = array<i32: 2, 1>} : memref<16x128xf32, #tpu.memory_space<vmem>>, vector<8x128xf32>
    %c1_34 = arith.constant 1 : index
    %c0_35 = arith.constant 0 : index
    %34 = tpu.strided_load %arg12[%c1_34, %c0_35] {strides = array<i32: 2, 1>} : memref<16x128xf32, #tpu.memory_space<vmem>>, vector<8x128xf32>
    %35 = arith.maximumf %33, %34 : vector<8x128xf32>
    %cst_36 = arith.constant 0.000000e+00 : f32
    %36 = vector.broadcast %cst_36 : f32 to vector<1x160xf32>
    %c0_37 = arith.constant 0 : index
    %c0_38 = arith.constant 0 : index
    %37 = vector.load %arg13[%c0_37, %c0_38] : memref<10x160xf32, #tpu.memory_space<vmem>>, vector<1x160xf32>
    tpu.vector_store %arg13[%c0_37, %c0_38], %36 {strides = array<i32>} : memref<10x160xf32, #tpu.memory_space<vmem>>, vector<1x160xf32>,
    %cst_39 = arith.constant 0.000000e+00 : f32
    %38 = vector.broadcast %cst_39 : f32 to vector<1x160xf32>
    %c9 = arith.constant 9 : index
    %c0_40 = arith.constant 0 : index
    %39 = vector.load %arg13[%c9, %c0_40] : memref<10x160xf32, #tpu.memory_space<vmem>>, vector<1x160xf32>
    tpu.vector_store %arg13[%c9, %c0_40], %38 {strides = array<i32>} : memref<10x160xf32, #tpu.memory_space<vmem>>, vector<1x160xf32>,
    %cst_41 = arith.constant 0.000000e+00 : f32
    %40 = vector.broadcast %cst_41 : f32 to vector<10x16xf32>
    %c0_42 = arith.constant 0 : index
    %c0_43 = arith.constant 0 : index
    %41 = vector.load %arg13[%c0_42, %c0_43] : memref<10x160xf32, #tpu.memory_space<vmem>>, vector<10x16xf32>
    tpu.vector_store %arg13[%c0_42, %c0_43], %40 {strides = array<i32>} : memref<10x160xf32, #tpu.memory_space<vmem>>, vector<10x16xf32>,
    %cst_44 = arith.constant 0.000000e+00 : f32
    %42 = vector.broadcast %cst_44 : f32 to vector<10x16xf32>
    %c0_45 = arith.constant 0 : index
    %c144 = arith.constant 144 : index
    %43 = vector.load %arg13[%c0_45, %c144] : memref<10x160xf32, #tpu.memory_space<vmem>>, vector<10x16xf32>
    tpu.vector_store %arg13[%c0_45, %c144], %42 {strides = array<i32>} : memref<10x160xf32, #tpu.memory_space<vmem>>, vector<10x16xf32>,
    %c1_46 = arith.constant 1 : index
    %c16 = arith.constant 16 : index
    %44 = vector.load %arg13[%c1_46, %c16] : memref<10x160xf32, #tpu.memory_space<vmem>>, vector<8x128xf32>
    tpu.vector_store %arg13[%c1_46, %c16], %35 {strides = array<i32>} : memref<10x160xf32, #tpu.memory_space<vmem>>, vector<8x128xf32>,
    %c0_47 = arith.constant 0 : index
    %c0_48 = arith.constant 0 : index
    %45 = vector.load %arg13[%c0_47, %c0_48] : memref<10x160xf32, #tpu.memory_space<vmem>>, vector<8x160xf32>
    %c0_49 = arith.constant 0 : index
    %c0_50 = arith.constant 0 : index
    %c0_51 = arith.constant 0 : index
    %46 = vector.load %arg4[%c0_49, %c0_50, %c0_51] : memref<3x160x64xf32, #tpu.memory_space<vmem>>, vector<1x160x64xf32>
    %47 = vector.shape_cast %46 : vector<1x160x64xf32> to vector<160x64xf32>
    %cst_52 = arith.constant dense<0.000000e+00> : vector<8x64xf32>
    %48 = tpu.matmul %45, %47, %cst_52 {dimension_numbers = #tpu.dot_dimension_numbers<[1], [0], [0], [1], [0, 0, 1, 1], [], []>} : vector<8x160xf32>, vector<160x64xf32>, vector<8x64xf32> -> vector<8x64xf32>
    %c1_53 = arith.constant 1 : index
    %c0_54 = arith.constant 0 : index
    %49 = vector.load %arg13[%c1_53, %c0_54] : memref<10x160xf32, #tpu.memory_space<vmem>>, vector<8x160xf32>
    %c1_55 = arith.constant 1 : index
    %c0_56 = arith.constant 0 : index
    %c0_57 = arith.constant 0 : index
    %50 = vector.load %arg4[%c1_55, %c0_56, %c0_57] : memref<3x160x64xf32, #tpu.memory_space<vmem>>, vector<1x160x64xf32>
    %51 = vector.shape_cast %50 : vector<1x160x64xf32> to vector<160x64xf32>
    %cst_58 = arith.constant dense<0.000000e+00> : vector<8x64xf32>
    %52 = tpu.matmul %49, %51, %cst_58 {dimension_numbers = #tpu.dot_dimension_numbers<[1], [0], [0], [1], [0, 0, 1, 1], [], []>} : vector<8x160xf32>, vector<160x64xf32>, vector<8x64xf32> -> vector<8x64xf32>
    %53 = arith.addf %48, %52 : vector<8x64xf32>
    %c2_59 = arith.constant 2 : index
    %c0_60 = arith.constant 0 : index
    %54 = vector.load %arg13[%c2_59, %c0_60] : memref<10x160xf32, #tpu.memory_space<vmem>>, vector<8x160xf32>
    %c2_61 = arith.constant 2 : index
    %c0_62 = arith.constant 0 : index
    %c0_63 = arith.constant 0 : index
    %55 = vector.load %arg4[%c2_61, %c0_62, %c0_63] : memref<3x160x64xf32, #tpu.memory_space<vmem>>, vector<1x160x64xf32>
    %56 = vector.shape_cast %55 : vector<1x160x64xf32> to vector<160x64xf32>
    %cst_64 = arith.constant dense<0.000000e+00> : vector<8x64xf32>
    %57 = tpu.matmul %54, %56, %cst_64 {dimension_numbers = #tpu.dot_dimension_numbers<[1], [0], [0], [1], [0, 0, 1, 1], [], []>} : vector<8x160xf32>, vector<160x64xf32>, vector<8x64xf32> -> vector<8x64xf32>
    %58 = arith.addf %53, %57 : vector<8x64xf32>
    %c0_65 = arith.constant 0 : index
    %c0_66 = arith.constant 0 : index
    %59 = vector.load %arg5[%c0_65, %c0_66] : memref<1x64xf32, #tpu.memory_space<vmem>>, vector<1x64xf32>
    %60 = vector.broadcast %59 : vector<1x64xf32> to vector<8x64xf32>
    %61 = arith.addf %58, %60 : vector<8x64xf32>
    %62 = math.tanh %61 : vector<8x64xf32>
    %63 = vector.extract_strided_slice %62 {offsets = [0, 0], sizes = [8, 32], strides = [1, 1]} : vector<8x64xf32> to vector<8x32xf32>
    %64 = vector.extract_strided_slice %62 {offsets = [0, 32], sizes = [8, 32], strides = [1, 1]} : vector<8x64xf32> to vector<8x32xf32>
    %65 = arith.maximumf %63, %64 : vector<8x32xf32>
    %c0_67 = arith.constant 0 : index
    %c0_68 = arith.constant 0 : index
    %66 = vector.load %arg14[%c0_67, %c0_68] : memref<8x32xf32, #tpu.memory_space<vmem>>, vector<8x32xf32>
    tpu.vector_store %arg14[%c0_67, %c0_68], %65 {strides = array<i32>} : memref<8x32xf32, #tpu.memory_space<vmem>>, vector<8x32xf32>,
    %c0_69 = arith.constant 0 : index
    %c0_70 = arith.constant 0 : index
    %67 = tpu.strided_load %arg14[%c0_69, %c0_70] {strides = array<i32: 2, 1>} : memref<8x32xf32, #tpu.memory_space<vmem>>, vector<4x32xf32>
    %c1_71 = arith.constant 1 : index
    %c0_72 = arith.constant 0 : index
    %68 = tpu.strided_load %arg14[%c1_71, %c0_72] {strides = array<i32: 2, 1>} : memref<8x32xf32, #tpu.memory_space<vmem>>, vector<4x32xf32>
    %69 = arith.maximumf %67, %68 : vector<4x32xf32>
    %c0_73 = arith.constant 0 : index
    %c0_74 = arith.constant 0 : index
    %70 = vector.load %arg7[%c0_73, %c0_74] : memref<1x32xf32, #tpu.memory_space<vmem>>, vector<1x32xf32>
    %71 = vector.extract_strided_slice %69 {offsets = [0, 0], sizes = [1, 32], strides = [1, 1]} : vector<4x32xf32> to vector<1x32xf32>
    %c0_75 = arith.constant 0 : index
    %c0_76 = arith.constant 0 : index
    %72 = vector.load %arg6[%c0_75, %c0_76] : memref<128x32xf32, #tpu.memory_space<vmem>>, vector<32x32xf32>
    %cst_77 = arith.constant dense<0.000000e+00> : vector<1x32xf32>
    %73 = tpu.matmul %71, %72, %cst_77 {dimension_numbers = #tpu.dot_dimension_numbers<[1], [0], [0], [1], [0, 0, 1, 1], [], []>} : vector<1x32xf32>, vector<32x32xf32>, vector<1x32xf32> -> vector<1x32xf32>
    %74 = arith.addf %70, %73 : vector<1x32xf32>
    %75 = vector.extract_strided_slice %69 {offsets = [1, 0], sizes = [1, 32], strides = [1, 1]} : vector<4x32xf32> to vector<1x32xf32>
    %c32 = arith.constant 32 : index
    %c0_78 = arith.constant 0 : index
    %76 = vector.load %arg6[%c32, %c0_78] : memref<128x32xf32, #tpu.memory_space<vmem>>, vector<32x32xf32>
    %cst_79 = arith.constant dense<0.000000e+00> : vector<1x32xf32>
    %77 = tpu.matmul %75, %76, %cst_79 {dimension_numbers = #tpu.dot_dimension_numbers<[1], [0], [0], [1], [0, 0, 1, 1], [], []>} : vector<1x32xf32>, vector<32x32xf32>, vector<1x32xf32> -> vector<1x32xf32>
    %78 = arith.addf %74, %77 : vector<1x32xf32>
    %79 = vector.extract_strided_slice %69 {offsets = [2, 0], sizes = [1, 32], strides = [1, 1]} : vector<4x32xf32> to vector<1x32xf32>
    %c64 = arith.constant 64 : index
    %c0_80 = arith.constant 0 : index
    %80 = vector.load %arg6[%c64, %c0_80] : memref<128x32xf32, #tpu.memory_space<vmem>>, vector<32x32xf32>
    %cst_81 = arith.constant dense<0.000000e+00> : vector<1x32xf32>
    %81 = tpu.matmul %79, %80, %cst_81 {dimension_numbers = #tpu.dot_dimension_numbers<[1], [0], [0], [1], [0, 0, 1, 1], [], []>} : vector<1x32xf32>, vector<32x32xf32>, vector<1x32xf32> -> vector<1x32xf32>
    %82 = arith.addf %78, %81 : vector<1x32xf32>
    %83 = vector.extract_strided_slice %69 {offsets = [3, 0], sizes = [1, 32], strides = [1, 1]} : vector<4x32xf32> to vector<1x32xf32>
    %c96 = arith.constant 96 : index
    %c0_82 = arith.constant 0 : index
    %84 = vector.load %arg6[%c96, %c0_82] : memref<128x32xf32, #tpu.memory_space<vmem>>, vector<32x32xf32>
    %cst_83 = arith.constant dense<0.000000e+00> : vector<1x32xf32>
    %85 = tpu.matmul %83, %84, %cst_83 {dimension_numbers = #tpu.dot_dimension_numbers<[1], [0], [0], [1], [0, 0, 1, 1], [], []>} : vector<1x32xf32>, vector<32x32xf32>, vector<1x32xf32> -> vector<1x32xf32>
    %86 = arith.addf %82, %85 : vector<1x32xf32>
    %87 = math.tanh %86 : vector<1x32xf32>
    %c0_84 = arith.constant 0 : index
    %c0_85 = arith.constant 0 : index
    %88 = vector.load %arg8[%c0_84, %c0_85] : memref<32x10xf32, #tpu.memory_space<vmem>>, vector<32x10xf32>
    %cst_86 = arith.constant dense<0.000000e+00> : vector<1x10xf32>
    %89 = tpu.matmul %87, %88, %cst_86 {dimension_numbers = #tpu.dot_dimension_numbers<[1], [0], [0], [1], [0, 0, 1, 1], [], []>} : vector<1x32xf32>, vector<32x10xf32>, vector<1x10xf32> -> vector<1x10xf32>
    %c0_87 = arith.constant 0 : index
    %c0_88 = arith.constant 0 : index
    %90 = vector.load %arg9[%c0_87, %c0_88] : memref<1x10xf32, #tpu.memory_space<vmem>>, vector<1x10xf32>
    %91 = arith.addf %89, %90 : vector<1x10xf32>
    %c0_89 = arith.constant 0 : index
    %c0_90 = arith.constant 0 : index
    %c0_91 = arith.constant 0 : index
    %92 = vector.load %arg10[%c0_89, %c0_90, %c0_91] : memref<1x1x10xf32, #tpu.memory_space<vmem>>, vector<1x1x10xf32>
    %93 = vector.shape_cast %92 : vector<1x1x10xf32> to vector<1x10xf32>
    %94 = vector.shape_cast %91 : vector<1x10xf32> to vector<1x1x10xf32>
    tpu.vector_store %arg10[%c0_89, %c0_90, %c0_91], %94 {strides = array<i32>} : memref<1x1x10xf32, #tpu.memory_space<vmem>>, vector<1x1x10xf32>,
    return
  }
  func.func @transform_0(%arg0: i32) -> (i32, i32, i32) {
    %c0_i32 = arith.constant 0 : i32
    %c0_i32_0 = arith.constant 0 : i32
    %c0_i32_1 = arith.constant 0 : i32
    return %arg0, %c0_i32, %c0_i32_0 : i32, i32, i32
  }
  func.func @transform_1(%arg0: i32) -> (i32, i32, i32) {
    %c0_i32 = arith.constant 0 : i32
    %c0_i32_0 = arith.constant 0 : i32
    %c0_i32_1 = arith.constant 0 : i32
    %c0_i32_2 = arith.constant 0 : i32
    return %c0_i32, %c0_i32_0, %c0_i32_1 : i32, i32, i32
  }
  func.func @transform_2(%arg0: i32) -> (i32, i32) {
    %c0_i32 = arith.constant 0 : i32
    %c0_i32_0 = arith.constant 0 : i32
    %c0_i32_1 = arith.constant 0 : i32
    return %c0_i32, %c0_i32_0 : i32, i32
  }
  func.func @transform_3(%arg0: i32) -> (i32, i32, i32) {
    %c0_i32 = arith.constant 0 : i32
    %c0_i32_0 = arith.constant 0 : i32
    %c0_i32_1 = arith.constant 0 : i32
    %c0_i32_2 = arith.constant 0 : i32
    return %c0_i32, %c0_i32_0, %c0_i32_1 : i32, i32, i32
  }
  func.func @transform_4(%arg0: i32) -> (i32, i32) {
    %c0_i32 = arith.constant 0 : i32
    %c0_i32_0 = arith.constant 0 : i32
    %c0_i32_1 = arith.constant 0 : i32
    return %c0_i32, %c0_i32_0 : i32, i32
  }
  func.func @transform_5(%arg0: i32) -> (i32, i32) {
    %c0_i32 = arith.constant 0 : i32
    %c0_i32_0 = arith.constant 0 : i32
    %c0_i32_1 = arith.constant 0 : i32
    return %c0_i32, %c0_i32_0 : i32, i32
  }
  func.func @transform_6(%arg0: i32) -> (i32, i32) {
    %c0_i32 = arith.constant 0 : i32
    %c0_i32_0 = arith.constant 0 : i32
    %c0_i32_1 = arith.constant 0 : i32
    return %c0_i32, %c0_i32_0 : i32, i32
  }
  func.func @transform_7(%arg0: i32) -> (i32, i32) {
    %c0_i32 = arith.constant 0 : i32
    %c0_i32_0 = arith.constant 0 : i32
    %c0_i32_1 = arith.constant 0 : i32
    return %c0_i32, %c0_i32_0 : i32, i32
  }
  func.func @transform_8(%arg0: i32) -> (i32, i32) {
    %c0_i32 = arith.constant 0 : i32
    %c0_i32_0 = arith.constant 0 : i32
    %c0_i32_1 = arith.constant 0 : i32
    return %c0_i32, %c0_i32_0 : i32, i32
  }
  func.func @transform_9(%arg0: i32) -> (i32, i32, i32) {
    %c0_i32 = arith.constant 0 : i32
    %c0_i32_0 = arith.constant 0 : i32
    %c0_i32_1 = arith.constant 0 : i32
    return %arg0, %c0_i32, %c0_i32_0 : i32, i32, i32
  }
}

</mosaic_0001>

<llo_original>
// kernel: net_forward.1
$region0: #{net_forward.1}
  #allocation0 [shape = 'u32[]', space=smem, size = 0x4, offset = 0x4, fixed_abs, tag = 'smem constant byte address 0x4 - core index']
  #allocation1 [shape = 'u32[72,128]{1,0:T(1,128)}', space=vmem, size = 0x9000, scoped, tag = 'internal scratch']
  #allocation2 [shape = 'f32[18,72]{1,0:T(8,128)}', space=vmem, size = 0x3000, scoped, tag = 'scratch operand']
  #allocation3 [shape = 'f32[16,128]{1,0:T(8,128)}', space=vmem, size = 0x2000, scoped, tag = 'scratch operand']
  #allocation4 [shape = 'f32[10,160]{1,0:T(8,128)}', space=vmem, size = 0x4000, scoped, tag = 'scratch operand']
  #allocation5 [shape = 'f32[8,32]{1,0:T(8,128)}', space=vmem, size = 0x1000, scoped, tag = 'scratch operand']
  %s0 = inlined_call_operand.vmem [shape: f32[2,16,64], index: 0, kind: input, shape index: {}]
  %s1 = inlined_call_operand.vmem [shape: f32[3,72,256], index: 1, kind: input, shape index: {}]
  %s2 = inlined_call_operand.vmem [shape: f32[1,256], index: 2, kind: input, shape index: {}]
  %s3 = inlined_call_operand.vmem [shape: f32[3,160,64], index: 3, kind: input, shape index: {}]
  %s4 = inlined_call_operand.vmem [shape: f32[1,64], index: 4, kind: input, shape index: {}]
  %s5 = inlined_call_operand.vmem [shape: f32[128,32], index: 5, kind: input, shape index: {}]
  %s6 = inlined_call_operand.vmem [shape: f32[1,32], index: 6, kind: input, shape index: {}]
  %s7 = inlined_call_operand.vmem [shape: f32[32,10], index: 7, kind: input, shape index: {}]
  %s8 = inlined_call_operand.vmem [shape: f32[1,10], index: 8, kind: input, shape index: {}]
  %s9 = inlined_call_operand.hbm [shape: f32[2,1,10], index: 9, kind: output, shape index: {}]
  %s10 = sld [smem:[#allocation0]]
  $region69: #{net_forward.1} parent=0
    _
  %s12 = ssub.s32 1, %s10
  %s13 = scalar_select 0, %s12, %s10
  $region1: #{net_forward.1} parent=0
    #allocation6 [shape = 'u8[1024]{0}', space=vmem, size = 0x400, scoped, tag = 'output window, operand 0']
    #allocation7 [shape = 's32[2]{0}', space=sflag, size = 0x8, scoped, tag = 'scoped memory for net_forward.1']
    %14 = vsyncpa [#allocation7], 0
    %s15 = scalar_lea.sflag [#allocation7], 1
    %16 = vsyncpa %s15, 0
    loop: start=0, step=1, limit=4
    $region2: #{net_forward.1} parent=1 // loop_pre_header
      _
    $region3: #{net_forward.1} parent=1 // loop_header
      %s18 = sphi 0, %s22
      %p19 = scmp.ge.s32.totalorder %s18, 4
      %s28 = sphi 0, %s30
      %s31 = sphi 0, %s28
      %s32 = sphi 0, %s31
      %s48 = sphi 0, %s32
      %s52 = sphi 0, %s52
      %s54 = sphi 0, %s52
      %s55 = sphi 0, %s54
      %s69 = sphi 0, %s55
      %s73 = sphi 0, %s73
      %s75 = sphi 0, %s73
      %s76 = sphi 0, %s75
      %s90 = sphi 0, %s76
      %s94 = sphi 0, %s94
      %s96 = sphi 0, %s94
      %s97 = sphi 0, %s96
      %s111 = sphi 0, %s97
      %s115 = sphi 0, %s115
      %s117 = sphi 0, %s115
      %s118 = sphi 0, %s117
      %s132 = sphi 0, %s118
      %s136 = sphi 0, %s136
      %s138 = sphi 0, %s136
      %s139 = sphi 0, %s138
      %s153 = sphi 0, %s139
      %s157 = sphi 0, %s157
      %s159 = sphi 0, %s157
      %s160 = sphi 0, %s159
      %s174 = sphi 0, %s160
      %s178 = sphi 0, %s178
      %s180 = sphi 0, %s178
      %s181 = sphi 0, %s180
      %s195 = sphi 0, %s181
      %s199 = sphi 0, %s199
      %s201 = sphi 0, %s199
      %s202 = sphi 0, %s201
      %s216 = sphi 0, %s202
      %s222 = sphi 0, %s224
      %s225 = sphi 0, %s222
      %s226 = sphi 0, %s225
      %s242 = sphi 0, %s226
    $region4: #{net_forward.1} parent=1 // loop_header_branch
      %21 = sbr.rel (%p19) target = $region8
    $region5: #{net_forward.1} parent=1 // loop_body
      %s23 = ssub.s32 %s18, 1
      %s24 = ssub.s32 %s18, 2
      %s25 = sadd.s32 %s18, 1
      %s26 = ssub.s32 %s18, %s25
      %p27 = scmp.eq.s32.totalorder %s26, 0
      %s29 = sadd.s32 %s28, 1
      %s30 = scalar_select %p27, %s28, %s29
      %p33 = pneg %p27
      %p34 = scmp.eq.s32.totalorder %s18, 1
      %p35 = por %p33, %p34
      %p36 = scmp.ne.s32.totalorder %s28, %s31
      %p37 = scmp.eq.s32.totalorder %s18, 0
      %p38 = por %p36, %p37
      %p39 = scmp.ne.s32.totalorder %s28, %s31
      %p40 = scmp.eq.s32.totalorder %s23, 1
      %p41 = por %p39, %p40
      %p42 = scmp.ne.s32.totalorder %s31, %s32
      %p43 = scmp.eq.s32.totalorder %s23, 0
      %p44 = por %p42, %p43
      %p45 = scmp.ne.s32.totalorder %s31, %s32
      %p46 = scmp.eq.s32.totalorder %s24, 1
      %p47 = por %p45, %p46
      %p49 = scmp.ne.s32.totalorder %s32, %s48
      %p50 = scmp.eq.s32.totalorder %s24, 0
      %p51 = por %p49, %p50
      %s53 = sadd.s32 %s52, 1
      %p56 = scmp.eq.s32.totalorder %s18, 1
      %p57 = scmp.ne.s32.totalorder %s52, %s54
      %p58 = scmp.eq.s32.totalorder %s18, 0
      %p59 = por %p57, %p58
      %p60 = scmp.ne.s32.totalorder %s52, %s54
      %p61 = scmp.eq.s32.totalorder %s23, 1
      %p62 = por %p60, %p61
      %p63 = scmp.ne.s32.totalorder %s54, %s55
      %p64 = scmp.eq.s32.totalorder %s23, 0
      %p65 = por %p63, %p64
      %p66 = scmp.ne.s32.totalorder %s54, %s55
      %p67 = scmp.eq.s32.totalorder %s24, 1
      %p68 = por %p66, %p67
      %p70 = scmp.ne.s32.totalorder %s55, %s69
      %p71 = scmp.eq.s32.totalorder %s24, 0
      %p72 = por %p70, %p71
      %s74 = sadd.s32 %s73, 1
      %p77 = scmp.eq.s32.totalorder %s18, 1
      %p78 = scmp.ne.s32.totalorder %s73, %s75
      %p79 = scmp.eq.s32.totalorder %s18, 0
      %p80 = por %p78, %p79
      %p81 = scmp.ne.s32.totalorder %s73, %s75
      %p82 = scmp.eq.s32.totalorder %s23, 1
      %p83 = por %p81, %p82
      %p84 = scmp.ne.s32.totalorder %s75, %s76
      %p85 = scmp.eq.s32.totalorder %s23, 0
      %p86 = por %p84, %p85
      %p87 = scmp.ne.s32.totalorder %s75, %s76
      %p88 = scmp.eq.s32.totalorder %s24, 1
      %p89 = por %p87, %p88
      %p91 = scmp.ne.s32.totalorder %s76, %s90
      %p92 = scmp.eq.s32.totalorder %s24, 0
      %p93 = por %p91, %p92
      %s95 = sadd.s32 %s94, 1
      %p98 = scmp.eq.s32.totalorder %s18, 1
      %p99 = scmp.ne.s32.totalorder %s94, %s96
      %p100 = scmp.eq.s32.totalorder %s18, 0
      %p101 = por %p99, %p100
      %p102 = scmp.ne.s32.totalorder %s94, %s96
      %p103 = scmp.eq.s32.totalorder %s23, 1
      %p104 = por %p102, %p103
      %p105 = scmp.ne.s32.totalorder %s96, %s97
      %p106 = scmp.eq.s32.totalorder %s23, 0
      %p107 = por %p105, %p106
      %p108 = scmp.ne.s32.totalorder %s96, %s97
      %p109 = scmp.eq.s32.totalorder %s24, 1
      %p110 = por %p108, %p109
      %p112 = scmp.ne.s32.totalorder %s97, %s111
      %p113 = scmp.eq.s32.totalorder %s24, 0
      %p114 = por %p112, %p113
      %s116 = sadd.s32 %s115, 1
      %p119 = scmp.eq.s32.totalorder %s18, 1
      %p120 = scmp.ne.s32.totalorder %s115, %s117
      %p121 = scmp.eq.s32.totalorder %s18, 0
      %p122 = por %p120, %p121
      %p123 = scmp.ne.s32.totalorder %s115, %s117
      %p124 = scmp.eq.s32.totalorder %s23, 1
      %p125 = por %p123, %p124
      %p126 = scmp.ne.s32.totalorder %s117, %s118
      %p127 = scmp.eq.s32.totalorder %s23, 0
      %p128 = por %p126, %p127
      %p129 = scmp.ne.s32.totalorder %s117, %s118
      %p130 = scmp.eq.s32.totalorder %s24, 1
      %p131 = por %p129, %p130
      %p133 = scmp.ne.s32.totalorder %s118, %s132
      %p134 = scmp.eq.s32.totalorder %s24, 0
      %p135 = por %p133, %p134
      %s137 = sadd.s32 %s136, 1
      %p140 = scmp.eq.s32.totalorder %s18, 1
      %p141 = scmp.ne.s32.totalorder %s136, %s138
      %p142 = scmp.eq.s32.totalorder %s18, 0
      %p143 = por %p141, %p142
      %p144 = scmp.ne.s32.totalorder %s136, %s138
      %p145 = scmp.eq.s32.totalorder %s23, 1
      %p146 = por %p144, %p145
      %p147 = scmp.ne.s32.totalorder %s138, %s139
      %p148 = scmp.eq.s32.totalorder %s23, 0
      %p149 = por %p147, %p148
      %p150 = scmp.ne.s32.totalorder %s138, %s139
      %p151 = scmp.eq.s32.totalorder %s24, 1
      %p152 = por %p150, %p151
      %p154 = scmp.ne.s32.totalorder %s139, %s153
      %p155 = scmp.eq.s32.totalorder %s24, 0
      %p156 = por %p154, %p155
      %s158 = sadd.s32 %s157, 1
      %p161 = scmp.eq.s32.totalorder %s18, 1
      %p162 = scmp.ne.s32.totalorder %s157, %s159
      %p163 = scmp.eq.s32.totalorder %s18, 0
      %p164 = por %p162, %p163
      %p165 = scmp.ne.s32.totalorder %s157, %s159
      %p166 = scmp.eq.s32.totalorder %s23, 1
      %p167 = por %p165, %p166
      %p168 = scmp.ne.s32.totalorder %s159, %s160
      %p169 = scmp.eq.s32.totalorder %s23, 0
      %p170 = por %p168, %p169
      %p171 = scmp.ne.s32.totalorder %s159, %s160
      %p172 = scmp.eq.s32.totalorder %s24, 1
      %p173 = por %p171, %p172
      %p175 = scmp.ne.s32.totalorder %s160, %s174
      %p176 = scmp.eq.s32.totalorder %s24, 0
      %p177 = por %p175, %p176
      %s179 = sadd.s32 %s178, 1
      %p182 = scmp.eq.s32.totalorder %s18, 1
      %p183 = scmp.ne.s32.totalorder %s178, %s180
      %p184 = scmp.eq.s32.totalorder %s18, 0
      %p185 = por %p183, %p184
      %p186 = scmp.ne.s32.totalorder %s178, %s180
      %p187 = scmp.eq.s32.totalorder %s23, 1
      %p188 = por %p186, %p187
      %p189 = scmp.ne.s32.totalorder %s180, %s181
      %p190 = scmp.eq.s32.totalorder %s23, 0
      %p191 = por %p189, %p190
      %p192 = scmp.ne.s32.totalorder %s180, %s181
      %p193 = scmp.eq.s32.totalorder %s24, 1
      %p194 = por %p192, %p193
      %p196 = scmp.ne.s32.totalorder %s181, %s195
      %p197 = scmp.eq.s32.totalorder %s24, 0
      %p198 = por %p196, %p197
      %s200 = sadd.s32 %s199, 1
      %p203 = scmp.eq.s32.totalorder %s18, 1
      %p204 = scmp.ne.s32.totalorder %s199, %s201
      %p205 = scmp.eq.s32.totalorder %s18, 0
      %p206 = por %p204, %p205
      %p207 = scmp.ne.s32.totalorder %s199, %s201
      %p208 = scmp.eq.s32.totalorder %s23, 1
      %p209 = por %p207, %p208
      %p210 = scmp.ne.s32.totalorder %s201, %s202
      %p211 = scmp.eq.s32.totalorder %s23, 0
      %p212 = por %p210, %p211
      %p213 = scmp.ne.s32.totalorder %s201, %s202
      %p214 = scmp.eq.s32.totalorder %s24, 1
      %p215 = por %p213, %p214
      %p217 = scmp.ne.s32.totalorder %s202, %s216
      %p218 = scmp.eq.s32.totalorder %s24, 0
      %p219 = por %p217, %p218
      %s220 = ssub.s32 %s18, %s25
      %p221 = scmp.eq.s32.totalorder %s220, 0
      %s223 = sadd.s32 %s222, 1
      %s224 = scalar_select %p221, %s222, %s223
      %p227 = pneg %p221
      %p228 = scmp.eq.s32.totalorder %s18, 1
      %p229 = por %p227, %p228
      %p230 = scmp.ne.s32.totalorder %s222, %s225
      %p231 = scmp.eq.s32.totalorder %s18, 0
      %p232 = por %p230, %p231
      %p233 = scmp.ne.s32.totalorder %s222, %s225
      %p234 = scmp.eq.s32.totalorder %s23, 1
      %p235 = por %p233, %p234
      %p236 = scmp.ne.s32.totalorder %s225, %s226
      %p237 = scmp.eq.s32.totalorder %s23, 0
      %p238 = por %p236, %p237
      %p239 = scmp.ne.s32.totalorder %s225, %s226
      %p240 = scmp.eq.s32.totalorder %s24, 1
      %p241 = por %p239, %p240
      %p243 = scmp.ne.s32.totalorder %s226, %s242
      %p244 = scmp.eq.s32.totalorder %s24, 0
      %p245 = por %p243, %p244
      %p246 = scmp.le.s32.totalorder 1, %s18
      %p247 = scmp.lt.s32.totalorder %s18, 3
      %p248 = pnand %p246, %p247
      %p249 = pneg %p248
      // Predicated region
      $region9: #{net_forward.1} parent=5 // pred_check
        _
      $region10: #{net_forward.1} parent=5 // pred_check_branch
        %251 = sbr.rel (%p248) target = $region12
      $region11: #{net_forward.1} parent=5 // pred_region
        %s252 = ssub.s32 %s18, 1
        // Predicated region
        $region13: #{net_forward.1} parent=11 // pred_check
          %p253 = pneg %p65
        $region14: #{net_forward.1} parent=11 // pred_check_branch
          %255 = sbr.rel (%p253) target = $region16
        $region15: #{net_forward.1} parent=11 // pred_region
          _
        $region16: #{net_forward.1} parent=11 // pred_fallthru
          _
        // Predicated region
        $region17: #{net_forward.1} parent=11 // pred_check
          %p256 = pneg %p86
        $region18: #{net_forward.1} parent=11 // pred_check_branch
          %258 = sbr.rel (%p256) target = $region20
        $region19: #{net_forward.1} parent=11 // pred_region
          _
        $region20: #{net_forward.1} parent=11 // pred_fallthru
          _
        // Predicated region
        $region21: #{net_forward.1} parent=11 // pred_check
          %p259 = pneg %p107
        $region22: #{net_forward.1} parent=11 // pred_check_branch
          %261 = sbr.rel (%p259) target = $region24
        $region23: #{net_forward.1} parent=11 // pred_region
          _
        $region24: #{net_forward.1} parent=11 // pred_fallthru
          _
        // Predicated region
        $region25: #{net_forward.1} parent=11 // pred_check
          %p262 = pneg %p128
        $region26: #{net_forward.1} parent=11 // pred_check_branch
          %264 = sbr.rel (%p262) target = $region28
        $region27: #{net_forward.1} parent=11 // pred_region
          _
        $region28: #{net_forward.1} parent=11 // pred_fallthru
          _
        // Predicated region
        $region29: #{net_forward.1} parent=11 // pred_check
          %p265 = pneg %p149
        $region30: #{net_forward.1} parent=11 // pred_check_branch
          %267 = sbr.rel (%p265) target = $region32
        $region31: #{net_forward.1} parent=11 // pred_region
          _
        $region32: #{net_forward.1} parent=11 // pred_fallthru
          _
        // Predicated region
        $region33: #{net_forward.1} parent=11 // pred_check
          %p268 = pneg %p170
        $region34: #{net_forward.1} parent=11 // pred_check_branch
          %270 = sbr.rel (%p268) target = $region36
        $region35: #{net_forward.1} parent=11 // pred_region
          _
        $region36: #{net_forward.1} parent=11 // pred_fallthru
          _
        // Predicated region
        $region37: #{net_forward.1} parent=11 // pred_check
          %p271 = pneg %p191
        $region38: #{net_forward.1} parent=11 // pred_check_branch
          %273 = sbr.rel (%p271) target = $region40
        $region39: #{net_forward.1} parent=11 // pred_region
          _
        $region40: #{net_forward.1} parent=11 // pred_fallthru
          _
        // Predicated region
        $region41: #{net_forward.1} parent=11 // pred_check
          %p274 = pneg %p212
        $region42: #{net_forward.1} parent=11 // pred_check_branch
          %276 = sbr.rel (%p274) target = $region44
        $region43: #{net_forward.1} parent=11 // pred_region
          _
        $region44: #{net_forward.1} parent=11 // pred_fallthru
          _
      $region12: #{net_forward.1} parent=5 // pred_fallthru
        _
      %p277 = scmp.lt.s32.totalorder %s18, 2
      // Predicated region
      $region45: #{net_forward.1} parent=5 // pred_check
        %p278 = pneg %p277
      $region46: #{net_forward.1} parent=5 // pred_check_branch
        %280 = sbr.rel (%p278) target = $region48
      $region47: #{net_forward.1} parent=5 // pred_region
        // Predicated region
        $region49: #{net_forward.1} parent=47 // pred_check
          %p281 = pneg %p38
        $region50: #{net_forward.1} parent=47 // pred_check_branch
          %283 = sbr.rel (%p281) target = $region52
        $region51: #{net_forward.1} parent=47 // pred_region
          %p284 = scmp.lt.s32.totalorder %s18, 1
          %s285 = scalar_select %p284, %s18, 1
          %s286 = smul.addr %s285, 2
          %s287 = smul.addr %s286, 8
          %s288 = scalar_lea.vmem %s0, %s287
        $region52: #{net_forward.1} parent=47 // pred_fallthru
          _
      $region48: #{net_forward.1} parent=5 // pred_fallthru
        _
      %p289 = scmp.le.s32.totalorder 1, %s18
      %p290 = scmp.lt.s32.totalorder %s18, 3
      %p291 = pnand %p289, %p290
      %p292 = pneg %p291
      // Predicated region
      $region53: #{net_forward.1} parent=5 // pred_check
        _
      $region54: #{net_forward.1} parent=5 // pred_check_branch
        %294 = sbr.rel (%p291) target = $region56
      $region55: #{net_forward.1} parent=5 // pred_region
        %s295 = ssub.s32 %s18, 1
        %p296 = scmp.lt.s32.totalorder %s23, 1
        %s297 = scalar_select %p296, %s23, 1
        %s298 = smul.addr %s297, 2
        %s299 = smul.addr %s298, 8
        %s300 = scalar_lea.vmem %s0, %s299
        %p301 = pneg %p44
        %p302 = pneg %p41
        %p303 = pneg %p65
        %p304 = pneg %p62
        %p305 = pneg %p86
        %p306 = pneg %p83
        %p307 = pneg %p107
        %p308 = pneg %p104
        %p309 = pneg %p128
        %p310 = pneg %p125
        %p311 = pneg %p149
        %p312 = pneg %p146
        %p313 = pneg %p170
        %p314 = pneg %p167
        %p315 = pneg %p191
        %p316 = pneg %p188
        %p317 = pneg %p212
        %p318 = pneg %p209
        %p319 = pneg %p238
        %p320 = pneg %p235
        %s321 = sand.u32 %s225, 1
        %s322 = scalar_lea.sflag [#allocation7], %s321
        %s323 = sand.u32 %s225, 1
        %s324 = scalar_lea.vmem [#allocation6], %s323
        %p325 = scmp.lt.s32.totalorder %s23, 1
        %s326 = scalar_select %p325, %s23, 1
        %s327 = smul.addr %s326, 2
        %s328 = smul.addr %s327, 8
        %s329 = scalar_lea.vmem %s0, %s328
        %vm330 = vcmask 581632
        %331 = vst.msk [vmem:[#allocation2] sm:$0x1] %vm330, 0.0
        %332 = vst.msk [vmem:[#allocation2 + $0x11] sm:$0x1] %vm330, 0.0
        %vm333 = vcmask 31744
        %334 = vst.msk [vmem:[#allocation2] sm:$0xff] %vm333, 0.0
        %335 = vst.msk [vmem:[#allocation2 + $0x8] sm:$0xff] %vm333, 0.0
        %vm336 = vcmask 25600
        %337 = vst.msk [vmem:[#allocation2 + $0x10] sm:$0x3] %vm336, 0.0
        %vm338 = vcmask 589344
        %339 = vst.msk [vmem:[#allocation2] sm:$0xff] %vm338, 0.0
        %340 = vst.msk [vmem:[#allocation2 + $0x8] sm:$0xff] %vm338, 0.0
        %vm341 = vcmask 583200
        %342 = vst.msk [vmem:[#allocation2 + $0x10] sm:$0x3] %vm341, 0.0
        %v343 = vld [vmem:[%s329] sm:$0xff]
        %v344 = vld [vmem:[%s329 + $0x8] sm:$0xff]
        %347 = vrot.lane.b32.xlu0 %v343, 4
        %v348 = vpop.permute.xlu0 %347
        %349 = vrot.lane.b32.xlu0 %v344, 4
        %v350 = vpop.permute.xlu0 %349
        %vm353 = vcmask 556064
        %354 = vst.msk [vmem:[#allocation2 + $0x1] sm:$0xff] %vm353, %v348
        %355 = vst.msk [vmem:[#allocation2 + $0x9] sm:$0xff] %vm353, %v350
        %v356 = vld [vmem:[#allocation2] sm:$0xff]
        %v357 = vld [vmem:[#allocation2 + $0x8] sm:$0xff]
        %v358 = vld [vmem:[%s1] sm:$0xff]
        %v359 = vld [vmem:[%s1 + $0x8] sm:$0xff]
        %v360 = vld [vmem:[%s1 + $0x10] sm:$0xff]
        %v361 = vld [vmem:[%s1 + $0x18] sm:$0xff]
        %v362 = vld [vmem:[%s1 + $0x20] sm:$0xff]
        %v363 = vld [vmem:[%s1 + $0x28] sm:$0xff]
        %v364 = vld [vmem:[%s1 + $0x30] sm:$0xff]
        %v365 = vld [vmem:[%s1 + $0x38] sm:$0xff]
        %v366 = vld [vmem:[%s1 + $0x40] sm:$0xff]
        %v367 = vld [vmem:[%s1 + $0x48] sm:$0xff]
        %v368 = vld [vmem:[%s1 + $0x50] sm:$0xff]
        %v369 = vld [vmem:[%s1 + $0x58] sm:$0xff]
        %v370 = vld [vmem:[%s1 + $0x60] sm:$0xff]
        %v371 = vld [vmem:[%s1 + $0x68] sm:$0xff]
        %v372 = vld [vmem:[%s1 + $0x70] sm:$0xff]
        %v373 = vld [vmem:[%s1 + $0x78] sm:$0xff]
        %v374 = vld [vmem:[%s1 + $0x80] sm:$0xff]
        %v375 = vld [vmem:[%s1 + $0x88] sm:$0xff]
        %v376 = vld [vmem:[#allocation2 + $0x1] sm:$0xff]
        %v377 = vld [vmem:[#allocation2 + $0x9] sm:$0xff]
        %s378 = scalar_lea.vmem %s1, 144
        %v379 = vld [vmem:[%s378] sm:$0xff]
        %v380 = vld [vmem:[%s378 + $0x8] sm:$0xff]
        %v381 = vld [vmem:[%s378 + $0x10] sm:$0xff]
        %v382 = vld [vmem:[%s378 + $0x18] sm:$0xff]
        %v383 = vld [vmem:[%s378 + $0x20] sm:$0xff]
        %v384 = vld [vmem:[%s378 + $0x28] sm:$0xff]
        %v385 = vld [vmem:[%s378 + $0x30] sm:$0xff]
        %v386 = vld [vmem:[%s378 + $0x38] sm:$0xff]
        %v387 = vld [vmem:[%s378 + $0x40] sm:$0xff]
        %v388 = vld [vmem:[%s378 + $0x48] sm:$0xff]
        %v389 = vld [vmem:[%s378 + $0x50] sm:$0xff]
        %v390 = vld [vmem:[%s378 + $0x58] sm:$0xff]
        %v391 = vld [vmem:[%s378 + $0x60] sm:$0xff]
        %v392 = vld [vmem:[%s378 + $0x68] sm:$0xff]
        %v393 = vld [vmem:[%s378 + $0x70] sm:$0xff]
        %v394 = vld [vmem:[%s378 + $0x78] sm:$0xff]
        %v395 = vld [vmem:[%s378 + $0x80] sm:$0xff]
        %v396 = vld [vmem:[%s378 + $0x88] sm:$0xff]
        %vm397 = vcmask 588800
        %v399 = vsel %vm397, %v376, 0
        %v402 = vsel %vm397, %v377, 0
        %404 = vmatpush.msra.mxu0 0.0
        %405 = vmatpush.msra.mxu0 0.0
        %406 = vmatpush.msra.mxu0 0.0
        %407 = vmatpush.msra.mxu0 0.0
        %408 = vmatpush.msra.mxu0 0.0
        %409 = vmatpush.msra.mxu0 0.0
        %410 = vmatpush.msra.mxu0 0.0
        %411 = vmatpush.msra.mxu0 %v395
        %412 = vmatpush.msra.mxu0 %v393
        %413 = vmatpush.msra.mxu0 %v391
        %414 = vmatpush.msra.mxu0 %v389
        %415 = vmatpush.msra.mxu0 %v387
        %416 = vmatpush.msra.mxu0 %v385
        %417 = vmatpush.msra.mxu0 %v383
        %418 = vmatpush.msra.mxu0 %v381
        %419 = vmatpush.msra.mxu0 %v379
        %420 = vmatmul.f32.gmra.mxu0 %v399
        %v421 = vpop.f32.mrf.mxu0
        %v422 = vadd.f32 0.0, %v421
        %423 = vmatmul.f32.gmra.mxu0 %v402
        %v424 = vpop.f32.mrf.mxu0
        %v425 = vadd.f32 0.0, %v424
        %426 = vdwg.mxu0
        %427 = vmatpush.msra.mxu0 0.0
        %428 = vmatpush.msra.mxu0 0.0
        %429 = vmatpush.msra.mxu0 0.0
        %430 = vmatpush.msra.mxu0 0.0
        %431 = vmatpush.msra.mxu0 0.0
        %432 = vmatpush.msra.mxu0 0.0
        %433 = vmatpush.msra.mxu0 0.0
        %434 = vmatpush.msra.mxu0 %v396
        %435 = vmatpush.msra.mxu0 %v394
        %436 = vmatpush.msra.mxu0 %v392
        %437 = vmatpush.msra.mxu0 %v390
        %438 = vmatpush.msra.mxu0 %v388
        %439 = vmatpush.msra.mxu0 %v386
        %440 = vmatpush.msra.mxu0 %v384
        %441 = vmatpush.msra.mxu0 %v382
        %442 = vmatpush.msra.mxu0 %v380
        %443 = vmatmul.f32.gmra.mxu0 %v399
        %v444 = vpop.f32.mrf.mxu0
        %v445 = vadd.f32 0.0, %v444
        %446 = vmatmul.f32.gmra.mxu0 %v402
        %v447 = vpop.f32.mrf.mxu0
        %v448 = vadd.f32 0.0, %v447
        %449 = vdwg.mxu0
        %v451 = vsel %vm397, %v356, 0
        %v454 = vsel %vm397, %v357, 0
        %456 = vmatpush.msra.mxu0 0.0
        %457 = vmatpush.msra.mxu0 0.0
        %458 = vmatpush.msra.mxu0 0.0
        %459 = vmatpush.msra.mxu0 0.0
        %460 = vmatpush.msra.mxu0 0.0
        %461 = vmatpush.msra.mxu0 0.0
        %462 = vmatpush.msra.mxu0 0.0
        %463 = vmatpush.msra.mxu0 %v374
        %464 = vmatpush.msra.mxu0 %v372
        %465 = vmatpush.msra.mxu0 %v370
        %466 = vmatpush.msra.mxu0 %v368
        %467 = vmatpush.msra.mxu0 %v366
        %468 = vmatpush.msra.mxu0 %v364
        %469 = vmatpush.msra.mxu0 %v362
        %470 = vmatpush.msra.mxu0 %v360
        %471 = vmatpush.msra.mxu0 %v358
        %472 = vmatmul.f32.gmra.mxu0 %v451
        %v473 = vpop.f32.mrf.mxu0
        %v474 = vadd.f32 %v422, %v473
        %475 = vmatmul.f32.gmra.mxu0 %v454
        %v476 = vpop.f32.mrf.mxu0
        %v477 = vadd.f32 %v425, %v476
        %478 = vdwg.mxu0
        %479 = vmatpush.msra.mxu0 0.0
        %480 = vmatpush.msra.mxu0 0.0
        %481 = vmatpush.msra.mxu0 0.0
        %482 = vmatpush.msra.mxu0 0.0
        %483 = vmatpush.msra.mxu0 0.0
        %484 = vmatpush.msra.mxu0 0.0
        %485 = vmatpush.msra.mxu0 0.0
        %486 = vmatpush.msra.mxu0 %v375
        %487 = vmatpush.msra.mxu0 %v373
        %488 = vmatpush.msra.mxu0 %v371
        %489 = vmatpush.msra.mxu0 %v369
        %490 = vmatpush.msra.mxu0 %v367
        %491 = vmatpush.msra.mxu0 %v365
        %492 = vmatpush.msra.mxu0 %v363
        %493 = vmatpush.msra.mxu0 %v361
        %494 = vmatpush.msra.mxu0 %v359
        %495 = vmatmul.f32.gmra.mxu0 %v451
        %v496 = vpop.f32.mrf.mxu0
        %v497 = vadd.f32 %v445, %v496
        %498 = vmatmul.f32.gmra.mxu0 %v454
        %v499 = vpop.f32.mrf.mxu0
        %v500 = vadd.f32 %v448, %v499
        %501 = vdwg.mxu0
        %v502 = vld [vmem:[#allocation2 + $0x2] sm:$0xff]
        %v503 = vld [vmem:[#allocation2 + $0xa] sm:$0xff]
        %s504 = scalar_lea.vmem %s1, 288
        %v505 = vld [vmem:[%s504] sm:$0xff]
        %v506 = vld [vmem:[%s504 + $0x8] sm:$0xff]
        %v507 = vld [vmem:[%s504 + $0x10] sm:$0xff]
        %v508 = vld [vmem:[%s504 + $0x18] sm:$0xff]
        %v509 = vld [vmem:[%s504 + $0x20] sm:$0xff]
        %v510 = vld [vmem:[%s504 + $0x28] sm:$0xff]
        %v511 = vld [vmem:[%s504 + $0x30] sm:$0xff]
        %v512 = vld [vmem:[%s504 + $0x38] sm:$0xff]
        %v513 = vld [vmem:[%s504 + $0x40] sm:$0xff]
        %v514 = vld [vmem:[%s504 + $0x48] sm:$0xff]
        %v515 = vld [vmem:[%s504 + $0x50] sm:$0xff]
        %v516 = vld [vmem:[%s504 + $0x58] sm:$0xff]
        %v517 = vld [vmem:[%s504 + $0x60] sm:$0xff]
        %v518 = vld [vmem:[%s504 + $0x68] sm:$0xff]
        %v519 = vld [vmem:[%s504 + $0x70] sm:$0xff]
        %v520 = vld [vmem:[%s504 + $0x78] sm:$0xff]
        %v521 = vld [vmem:[%s504 + $0x80] sm:$0xff]
        %v522 = vld [vmem:[%s504 + $0x88] sm:$0xff]
        %v524 = vsel %vm397, %v502, 0
        %v527 = vsel %vm397, %v503, 0
        %529 = vmatpush.msra.mxu0 0.0
        %530 = vmatpush.msra.mxu0 0.0
        %531 = vmatpush.msra.mxu0 0.0
        %532 = vmatpush.msra.mxu0 0.0
        %533 = vmatpush.msra.mxu0 0.0
        %534 = vmatpush.msra.mxu0 0.0
        %535 = vmatpush.msra.mxu0 0.0
        %536 = vmatpush.msra.mxu0 %v521
        %537 = vmatpush.msra.mxu0 %v519
        %538 = vmatpush.msra.mxu0 %v517
        %539 = vmatpush.msra.mxu0 %v515
        %540 = vmatpush.msra.mxu0 %v513
        %541 = vmatpush.msra.mxu0 %v511
        %542 = vmatpush.msra.mxu0 %v509
        %543 = vmatpush.msra.mxu0 %v507
        %544 = vmatpush.msra.mxu0 %v505
        %545 = vmatmul.f32.gmra.mxu0 %v524
        %v546 = vpop.f32.mrf.mxu0
        %v547 = vadd.f32 0.0, %v546
        %548 = vmatmul.f32.gmra.mxu0 %v527
        %v549 = vpop.f32.mrf.mxu0
        %v550 = vadd.f32 0.0, %v549
        %551 = vdwg.mxu0
        %552 = vmatpush.msra.mxu0 0.0
        %553 = vmatpush.msra.mxu0 0.0
        %554 = vmatpush.msra.mxu0 0.0
        %555 = vmatpush.msra.mxu0 0.0
        %556 = vmatpush.msra.mxu0 0.0
        %557 = vmatpush.msra.mxu0 0.0
        %558 = vmatpush.msra.mxu0 0.0
        %559 = vmatpush.msra.mxu0 %v522
        %560 = vmatpush.msra.mxu0 %v520
        %561 = vmatpush.msra.mxu0 %v518
        %562 = vmatpush.msra.mxu0 %v516
        %563 = vmatpush.msra.mxu0 %v514
        %564 = vmatpush.msra.mxu0 %v512
        %565 = vmatpush.msra.mxu0 %v510
        %566 = vmatpush.msra.mxu0 %v508
        %567 = vmatpush.msra.mxu0 %v506
        %568 = vmatmul.f32.gmra.mxu0 %v524
        %v569 = vpop.f32.mrf.mxu0
        %v570 = vadd.f32 0.0, %v569
        %571 = vmatmul.f32.gmra.mxu0 %v527
        %v572 = vpop.f32.mrf.mxu0
        %v573 = vadd.f32 0.0, %v572
        %574 = vdwg.mxu0
        %v575 = vadd.f32 %v474, %v547
        %v576 = vadd.f32 %v497, %v570
        %v577 = vadd.f32 %v477, %v550
        %v578 = vadd.f32 %v500, %v573
        %v579 = vld [vmem:[%s2] sm:$0x3]
        %v581 = vperm.slane %v579, 0
        %v582 = vperm.slane %v579, 1
        %v585 = vadd.f32 %v575, %v581
        %v586 = vadd.f32 %v576, %v582
        %v587 = vadd.f32 %v577, %v581
        %v588 = vadd.f32 %v578, %v582
        %v589 = vtanh.pop %v585
        %v590 = vtanh.pop %v586
        %v591 = vtanh.pop %v587
        %v592 = vtanh.pop %v588
        %v593 = vmax.f32 %v589, %v590
        %v594 = vmax.f32 %v591, %v592
        %595 = vst [vmem:[#allocation3] sm:$0xff] %v593
        %596 = vst [vmem:[#allocation3 + $0x8] sm:$0xff] %v594
        %v597 = vld [vmem:[#allocation3] ss:$2 sm:$0xff]
        %s598 = scalar_lea.vmem [#allocation3], 1
        %v599 = vld [vmem:[%s598] ss:$2 sm:$0xff]
        %v600 = vmax.f32 %v597, %v599
        %v601 = vlaneseq
        %vm602 = vcmp.ge.s32.totalorder %v601, 0
        %vm603 = vcmp.lt.s32.totalorder %v601, 160
        %vm604 = vmand %vm602, %vm603
        %605 = vst.msk [vmem:[#allocation4] ss:$8 sm:$0x3] %vm604, 0.0
        %606 = vst.msk [vmem:[#allocation4] ss:$8 sm:$0x0] %vm604, 0.0
        %s607 = scalar_lea.vmem [#allocation4], 17
        %608 = vst.msk [vmem:[%s607] ss:$8 sm:$0x3] %vm604, 0.0
        %609 = vst.msk [vmem:[%s607] ss:$8 sm:$0x0] %vm604, 0.0
        %vm610 = vcmask 130048
        %611 = vst.msk [vmem:[#allocation4] sm:$0xff] %vm610, 0.0
        %vm612 = vcmask 123904
        %613 = vst.msk [vmem:[#allocation4 + $0x10] sm:$0x3] %vm612, 0.0
        %vm614 = vcmask 261248
        %615 = vst.msk [vmem:[#allocation4 + $0x8] sm:$0xff] %vm614, 0.0
        %vm616 = vcmask 255104
        %617 = vst.msk [vmem:[#allocation4 + $0x18] sm:$0x3] %vm616, 0.0
        %v619 = vrot.slane %v600, 7
        %620 = vrot.lane.b32.xlu0 %v619, 16
        %v621 = vpop.permute.xlu0 %620
        %vm623 = vcmask 1047681
        %624 = vst.msk [vmem:[#allocation4] sm:$0xfe] %vm623, %v621
        %vm625 = vcmask 130049
        %626 = vst.msk [vmem:[#allocation4 + $0x8] sm:$0xfe] %vm625, %v621
        %vm627 = vcmask 1040512
        %628 = vst.msk [vmem:[#allocation4 + $0x10] sm:$0x1] %vm627, %v621
        %vm629 = vcmask 122880
        %630 = vst.msk [vmem:[#allocation4 + $0x18] sm:$0x1] %vm629, %v621
        %v631 = vld [vmem:[#allocation4] sm:$0xff]
        %v632 = vld [vmem:[#allocation4 + $0x8] sm:$0xff]
        %v633 = vld [vmem:[%s3] sm:$0xff]
        %v634 = vld [vmem:[%s3 + $0x8] sm:$0xff]
        %v635 = vld [vmem:[%s3 + $0x10] sm:$0xff]
        %v636 = vld [vmem:[%s3 + $0x18] sm:$0xff]
        %v637 = vld [vmem:[%s3 + $0x20] sm:$0xff]
        %v638 = vld [vmem:[%s3 + $0x28] sm:$0xff]
        %v639 = vld [vmem:[%s3 + $0x30] sm:$0xff]
        %v640 = vld [vmem:[%s3 + $0x38] sm:$0xff]
        %v641 = vld [vmem:[%s3 + $0x40] sm:$0xff]
        %v642 = vld [vmem:[%s3 + $0x48] sm:$0xff]
        %v643 = vld [vmem:[%s3 + $0x50] sm:$0xff]
        %v644 = vld [vmem:[%s3 + $0x58] sm:$0xff]
        %v645 = vld [vmem:[%s3 + $0x60] sm:$0xff]
        %v646 = vld [vmem:[%s3 + $0x68] sm:$0xff]
        %v647 = vld [vmem:[%s3 + $0x70] sm:$0xff]
        %v648 = vld [vmem:[%s3 + $0x78] sm:$0xff]
        %v649 = vld [vmem:[%s3 + $0x80] sm:$0xff]
        %v650 = vld [vmem:[%s3 + $0x88] sm:$0xff]
        %v651 = vld [vmem:[%s3 + $0x90] sm:$0xff]
        %v652 = vld [vmem:[%s3 + $0x98] sm:$0xff]
        %v653 = vld [vmem:[#allocation4] sm:$0xfe]
        %v654 = vld [vmem:[#allocation4 + $0x8] sm:$0xfe]
        %v655 = vld [vmem:[#allocation4 + $0x10] sm:$0x1]
        %v656 = vld [vmem:[#allocation4 + $0x18] sm:$0x1]
        %s657 = scalar_lea.vmem %s3, 160
        %v658 = vld [vmem:[%s657] sm:$0xff]
        %v659 = vld [vmem:[%s657 + $0x8] sm:$0xff]
        %v660 = vld [vmem:[%s657 + $0x10] sm:$0xff]
        %v661 = vld [vmem:[%s657 + $0x18] sm:$0xff]
        %v662 = vld [vmem:[%s657 + $0x20] sm:$0xff]
        %v663 = vld [vmem:[%s657 + $0x28] sm:$0xff]
        %v664 = vld [vmem:[%s657 + $0x30] sm:$0xff]
        %v665 = vld [vmem:[%s657 + $0x38] sm:$0xff]
        %v666 = vld [vmem:[%s657 + $0x40] sm:$0xff]
        %v667 = vld [vmem:[%s657 + $0x48] sm:$0xff]
        %v668 = vld [vmem:[%s657 + $0x50] sm:$0xff]
        %v669 = vld [vmem:[%s657 + $0x58] sm:$0xff]
        %v670 = vld [vmem:[%s657 + $0x60] sm:$0xff]
        %v671 = vld [vmem:[%s657 + $0x68] sm:$0xff]
        %v672 = vld [vmem:[%s657 + $0x70] sm:$0xff]
        %v673 = vld [vmem:[%s657 + $0x78] sm:$0xff]
        %v674 = vld [vmem:[%s657 + $0x80] sm:$0xff]
        %v675 = vld [vmem:[%s657 + $0x88] sm:$0xff]
        %v676 = vld [vmem:[%s657 + $0x90] sm:$0xff]
        %v677 = vld [vmem:[%s657 + $0x98] sm:$0xff]
        %vm682 = vcmask 1046528
        %v683 = vrot.slane %v653, 1
        %v684 = vrot.slane %v655, 1
        %v685 = vsel %vm682, %v683, %v684
        %v686 = vrot.slane %v654, 1
        %v687 = vrot.slane %v656, 1
        %v688 = vsel %vm682, %v686, %v687
        %vm690 = vcmask 261120
        %v691 = vsel %vm690, %v688, 0
        %693 = vmatpush.msra.mxu0 %v673
        %694 = vmatpush.msra.mxu0 %v672
        %695 = vmatpush.msra.mxu0 %v671
        %696 = vmatpush.msra.mxu0 %v670
        %697 = vmatpush.msra.mxu0 %v669
        %698 = vmatpush.msra.mxu0 %v668
        %699 = vmatpush.msra.mxu0 %v667
        %700 = vmatpush.msra.mxu0 %v666
        %701 = vmatpush.msra.mxu0 %v665
        %702 = vmatpush.msra.mxu0 %v664
        %703 = vmatpush.msra.mxu0 %v663
        %704 = vmatpush.msra.mxu0 %v662
        %705 = vmatpush.msra.mxu0 %v661
        %706 = vmatpush.msra.mxu0 %v660
        %707 = vmatpush.msra.mxu0 %v659
        %708 = vmatpush.msra.mxu0 %v658
        %709 = vmatmul.f32.gmra.mxu0 %v685
        %v710 = vpop.f32.mrf.mxu0
        %v711 = vadd.f32 0.0, %v710
        %712 = vdwg.mxu0
        %713 = vmatpush.msra.mxu0 0.0
        %714 = vmatpush.msra.mxu0 0.0
        %715 = vmatpush.msra.mxu0 0.0
        %716 = vmatpush.msra.mxu0 0.0
        %717 = vmatpush.msra.mxu0 0.0
        %718 = vmatpush.msra.mxu0 0.0
        %719 = vmatpush.msra.mxu0 0.0
        %720 = vmatpush.msra.mxu0 0.0
        %721 = vmatpush.msra.mxu0 0.0
        %722 = vmatpush.msra.mxu0 0.0
        %723 = vmatpush.msra.mxu0 0.0
        %724 = vmatpush.msra.mxu0 0.0
        %725 = vmatpush.msra.mxu0 %v677
        %726 = vmatpush.msra.mxu0 %v676
        %727 = vmatpush.msra.mxu0 %v675
        %728 = vmatpush.msra.mxu0 %v674
        %729 = vmatmul.f32.gmra.mxu0 %v691
        %v730 = vpop.f32.mrf.mxu0
        %v731 = vadd.f32 %v711, %v730
        %732 = vdwg.mxu0
        %v734 = vsel %vm690, %v632, 0
        %736 = vmatpush.msra.mxu0 %v648
        %737 = vmatpush.msra.mxu0 %v647
        %738 = vmatpush.msra.mxu0 %v646
        %739 = vmatpush.msra.mxu0 %v645
        %740 = vmatpush.msra.mxu0 %v644
        %741 = vmatpush.msra.mxu0 %v643
        %742 = vmatpush.msra.mxu0 %v642
        %743 = vmatpush.msra.mxu0 %v641
        %744 = vmatpush.msra.mxu0 %v640
        %745 = vmatpush.msra.mxu0 %v639
        %746 = vmatpush.msra.mxu0 %v638
        %747 = vmatpush.msra.mxu0 %v637
        %748 = vmatpush.msra.mxu0 %v636
        %749 = vmatpush.msra.mxu0 %v635
        %750 = vmatpush.msra.mxu0 %v634
        %751 = vmatpush.msra.mxu0 %v633
        %752 = vmatmul.f32.gmra.mxu0 %v631
        %v753 = vpop.f32.mrf.mxu0
        %v754 = vadd.f32 %v731, %v753
        %755 = vdwg.mxu0
        %756 = vmatpush.msra.mxu0 0.0
        %757 = vmatpush.msra.mxu0 0.0
        %758 = vmatpush.msra.mxu0 0.0
        %759 = vmatpush.msra.mxu0 0.0
        %760 = vmatpush.msra.mxu0 0.0
        %761 = vmatpush.msra.mxu0 0.0
        %762 = vmatpush.msra.mxu0 0.0
        %763 = vmatpush.msra.mxu0 0.0
        %764 = vmatpush.msra.mxu0 0.0
        %765 = vmatpush.msra.mxu0 0.0
        %766 = vmatpush.msra.mxu0 0.0
        %767 = vmatpush.msra.mxu0 0.0
        %768 = vmatpush.msra.mxu0 %v652
        %769 = vmatpush.msra.mxu0 %v651
        %770 = vmatpush.msra.mxu0 %v650
        %771 = vmatpush.msra.mxu0 %v649
        %772 = vmatmul.f32.gmra.mxu0 %v734
        %v773 = vpop.f32.mrf.mxu0
        %v774 = vadd.f32 %v754, %v773
        %775 = vdwg.mxu0
        %v776 = vld [vmem:[#allocation4] sm:$0xfc]
        %v777 = vld [vmem:[#allocation4 + $0x8] sm:$0xfc]
        %v778 = vld [vmem:[#allocation4 + $0x10] sm:$0x3]
        %v779 = vld [vmem:[#allocation4 + $0x18] sm:$0x3]
        %s780 = scalar_lea.vmem %s3, 320
        %v781 = vld [vmem:[%s780] sm:$0xff]
        %v782 = vld [vmem:[%s780 + $0x8] sm:$0xff]
        %v783 = vld [vmem:[%s780 + $0x10] sm:$0xff]
        %v784 = vld [vmem:[%s780 + $0x18] sm:$0xff]
        %v785 = vld [vmem:[%s780 + $0x20] sm:$0xff]
        %v786 = vld [vmem:[%s780 + $0x28] sm:$0xff]
        %v787 = vld [vmem:[%s780 + $0x30] sm:$0xff]
        %v788 = vld [vmem:[%s780 + $0x38] sm:$0xff]
        %v789 = vld [vmem:[%s780 + $0x40] sm:$0xff]
        %v790 = vld [vmem:[%s780 + $0x48] sm:$0xff]
        %v791 = vld [vmem:[%s780 + $0x50] sm:$0xff]
        %v792 = vld [vmem:[%s780 + $0x58] sm:$0xff]
        %v793 = vld [vmem:[%s780 + $0x60] sm:$0xff]
        %v794 = vld [vmem:[%s780 + $0x68] sm:$0xff]
        %v795 = vld [vmem:[%s780 + $0x70] sm:$0xff]
        %v796 = vld [vmem:[%s780 + $0x78] sm:$0xff]
        %v797 = vld [vmem:[%s780 + $0x80] sm:$0xff]
        %v798 = vld [vmem:[%s780 + $0x88] sm:$0xff]
        %v799 = vld [vmem:[%s780 + $0x90] sm:$0xff]
        %v800 = vld [vmem:[%s780 + $0x98] sm:$0xff]
        %vm805 = vcmask 1045504
        %v806 = vrot.slane %v776, 2
        %v807 = vrot.slane %v778, 2
        %v808 = vsel %vm805, %v806, %v807
        %v809 = vrot.slane %v777, 2
        %v810 = vrot.slane %v779, 2
        %v811 = vsel %vm805, %v809, %v810
        %v813 = vsel %vm690, %v811, 0
        %815 = vmatpush.msra.mxu0 %v796
        %816 = vmatpush.msra.mxu0 %v795
        %817 = vmatpush.msra.mxu0 %v794
        %818 = vmatpush.msra.mxu0 %v793
        %819 = vmatpush.msra.mxu0 %v792
        %820 = vmatpush.msra.mxu0 %v791
        %821 = vmatpush.msra.mxu0 %v790
        %822 = vmatpush.msra.mxu0 %v789
        %823 = vmatpush.msra.mxu0 %v788
        %824 = vmatpush.msra.mxu0 %v787
        %825 = vmatpush.msra.mxu0 %v786
        %826 = vmatpush.msra.mxu0 %v785
        %827 = vmatpush.msra.mxu0 %v784
        %828 = vmatpush.msra.mxu0 %v783
        %829 = vmatpush.msra.mxu0 %v782
        %830 = vmatpush.msra.mxu0 %v781
        %831 = vmatmul.f32.gmra.mxu0 %v808
        %v832 = vpop.f32.mrf.mxu0
        %v833 = vadd.f32 0.0, %v832
        %834 = vdwg.mxu0
        %835 = vmatpush.msra.mxu0 0.0
        %836 = vmatpush.msra.mxu0 0.0
        %837 = vmatpush.msra.mxu0 0.0
        %838 = vmatpush.msra.mxu0 0.0
        %839 = vmatpush.msra.mxu0 0.0
        %840 = vmatpush.msra.mxu0 0.0
        %841 = vmatpush.msra.mxu0 0.0
        %842 = vmatpush.msra.mxu0 0.0
        %843 = vmatpush.msra.mxu0 0.0
        %844 = vmatpush.msra.mxu0 0.0
        %845 = vmatpush.msra.mxu0 0.0
        %846 = vmatpush.msra.mxu0 0.0
        %847 = vmatpush.msra.mxu0 %v800
        %848 = vmatpush.msra.mxu0 %v799
        %849 = vmatpush.msra.mxu0 %v798
        %850 = vmatpush.msra.mxu0 %v797
        %851 = vmatmul.f32.gmra.mxu0 %v813
        %v852 = vpop.f32.mrf.mxu0
        %v853 = vadd.f32 %v833, %v852
        %854 = vdwg.mxu0
        %v855 = vadd.f32 %v774, %v853
        %v856 = vld [vmem:[%s4] sm:$0x1]
        %v858 = vperm.slane %v856, 0
        %v860 = vadd.f32 %v855, %v858
        %v861 = vtanh.pop %v860
        %863 = vrot.lane.b32.xlu0 %v861, 96
        %v864 = vpop.permute.xlu0 %863
        %v866 = vmax.f32 %v861, %v864
        %867 = vst.msk [vmem:[#allocation5] sm:$0xff] %vm690, %v866
        %v868 = vld [vmem:[#allocation5] ss:$2 sm:$0xf]
        %s869 = scalar_lea.vmem [#allocation5], 1
        %v870 = vld [vmem:[%s869] ss:$2 sm:$0xf]
        %v871 = vmax.f32 %v868, %v870
        %v872 = vld [vmem:[%s6] sm:$0x1]
        %v873 = vld [vmem:[%s5] sm:$0xff]
        %v874 = vld [vmem:[%s5 + $0x8] sm:$0xff]
        %v875 = vld [vmem:[%s5 + $0x10] sm:$0xff]
        %v876 = vld [vmem:[%s5 + $0x18] sm:$0xff]
        %v878 = vsel %vm690, %v871, 0
        %880 = vmatpush.msra.mxu0 0.0
        %881 = vmatpush.msra.mxu0 0.0
        %882 = vmatpush.msra.mxu0 0.0
        %883 = vmatpush.msra.mxu0 0.0
        %884 = vmatpush.msra.mxu0 0.0
        %885 = vmatpush.msra.mxu0 0.0
        %886 = vmatpush.msra.mxu0 0.0
        %887 = vmatpush.msra.mxu0 0.0
        %888 = vmatpush.msra.mxu0 0.0
        %889 = vmatpush.msra.mxu0 0.0
        %890 = vmatpush.msra.mxu0 0.0
        %891 = vmatpush.msra.mxu0 0.0
        %892 = vmatpush.msra.mxu0 %v876
        %893 = vmatpush.msra.mxu0 %v875
        %894 = vmatpush.msra.mxu0 %v874
        %895 = vmatpush.msra.mxu0 %v873
        %896 = vmatmul.f32.gmra.mxu0 %v878
        %v897 = vpop.f32.mrf.mxu0
        %v898 = vadd.f32 0.0, %v897
        %899 = vdwg.mxu0
        %v900 = vadd.f32 %v872, %v898
        %v901 = vld [vmem:[%s5 + $0x20] sm:$0xff]
        %v902 = vld [vmem:[%s5 + $0x28] sm:$0xff]
        %v903 = vld [vmem:[%s5 + $0x30] sm:$0xff]
        %v904 = vld [vmem:[%s5 + $0x38] sm:$0xff]
        %v905 = vrot.slane %v871, 1
        %v906 = vsel %vm690, %v905, 0
        %908 = vmatpush.msra.mxu0 0.0
        %909 = vmatpush.msra.mxu0 0.0
        %910 = vmatpush.msra.mxu0 0.0
        %911 = vmatpush.msra.mxu0 0.0
        %912 = vmatpush.msra.mxu0 0.0
        %913 = vmatpush.msra.mxu0 0.0
        %914 = vmatpush.msra.mxu0 0.0
        %915 = vmatpush.msra.mxu0 0.0
        %916 = vmatpush.msra.mxu0 0.0
        %917 = vmatpush.msra.mxu0 0.0
        %918 = vmatpush.msra.mxu0 0.0
        %919 = vmatpush.msra.mxu0 0.0
        %920 = vmatpush.msra.mxu0 %v904
        %921 = vmatpush.msra.mxu0 %v903
        %922 = vmatpush.msra.mxu0 %v902
        %923 = vmatpush.msra.mxu0 %v901
        %924 = vmatmul.f32.gmra.mxu0 %v906
        %v925 = vpop.f32.mrf.mxu0
        %v926 = vadd.f32 0.0, %v925
        %927 = vdwg.mxu0
        %v928 = vadd.f32 %v900, %v926
        %v929 = vld [vmem:[%s5 + $0x40] sm:$0xff]
        %v930 = vld [vmem:[%s5 + $0x48] sm:$0xff]
        %v931 = vld [vmem:[%s5 + $0x50] sm:$0xff]
        %v932 = vld [vmem:[%s5 + $0x58] sm:$0xff]
        %v933 = vrot.slane %v871, 2
        %v934 = vsel %vm690, %v933, 0
        %936 = vmatpush.msra.mxu0 0.0
        %937 = vmatpush.msra.mxu0 0.0
        %938 = vmatpush.msra.mxu0 0.0
        %939 = vmatpush.msra.mxu0 0.0
        %940 = vmatpush.msra.mxu0 0.0
        %941 = vmatpush.msra.mxu0 0.0
        %942 = vmatpush.msra.mxu0 0.0
        %943 = vmatpush.msra.mxu0 0.0
        %944 = vmatpush.msra.mxu0 0.0
        %945 = vmatpush.msra.mxu0 0.0
        %946 = vmatpush.msra.mxu0 0.0
        %947 = vmatpush.msra.mxu0 0.0
        %948 = vmatpush.msra.mxu0 %v932
        %949 = vmatpush.msra.mxu0 %v931
        %950 = vmatpush.msra.mxu0 %v930
        %951 = vmatpush.msra.mxu0 %v929
        %952 = vmatmul.f32.gmra.mxu0 %v934
        %v953 = vpop.f32.mrf.mxu0
        %v954 = vadd.f32 0.0, %v953
        %955 = vdwg.mxu0
        %v956 = vadd.f32 %v928, %v954
        %v957 = vld [vmem:[%s5 + $0x60] sm:$0xff]
        %v958 = vld [vmem:[%s5 + $0x68] sm:$0xff]
        %v959 = vld [vmem:[%s5 + $0x70] sm:$0xff]
        %v960 = vld [vmem:[%s5 + $0x78] sm:$0xff]
        %v961 = vrot.slane %v871, 3
        %v962 = vsel %vm690, %v961, 0
        %964 = vmatpush.msra.mxu0 0.0
        %965 = vmatpush.msra.mxu0 0.0
        %966 = vmatpush.msra.mxu0 0.0
        %967 = vmatpush.msra.mxu0 0.0
        %968 = vmatpush.msra.mxu0 0.0
        %969 = vmatpush.msra.mxu0 0.0
        %970 = vmatpush.msra.mxu0 0.0
        %971 = vmatpush.msra.mxu0 0.0
        %972 = vmatpush.msra.mxu0 0.0
        %973 = vmatpush.msra.mxu0 0.0
        %974 = vmatpush.msra.mxu0 0.0
        %975 = vmatpush.msra.mxu0 0.0
        %976 = vmatpush.msra.mxu0 %v960
        %977 = vmatpush.msra.mxu0 %v959
        %978 = vmatpush.msra.mxu0 %v958
        %979 = vmatpush.msra.mxu0 %v957
        %980 = vmatmul.f32.gmra.mxu0 %v962
        %v981 = vpop.f32.mrf.mxu0
        %v982 = vadd.f32 0.0, %v981
        %983 = vdwg.mxu0
        %v984 = vadd.f32 %v956, %v982
        %v985 = vtanh.pop %v984
        %v986 = vld [vmem:[%s7] sm:$0xff]
        %v987 = vld [vmem:[%s7 + $0x8] sm:$0xff]
        %v988 = vld [vmem:[%s7 + $0x10] sm:$0xff]
        %v989 = vld [vmem:[%s7 + $0x18] sm:$0xff]
        %v990 = vld [vmem:[%s8] sm:$0x1]
        %v992 = vsel %vm690, %v985, 0
        %994 = vmatpush.msra.mxu0 0.0
        %995 = vmatpush.msra.mxu0 0.0
        %996 = vmatpush.msra.mxu0 0.0
        %997 = vmatpush.msra.mxu0 0.0
        %998 = vmatpush.msra.mxu0 0.0
        %999 = vmatpush.msra.mxu0 0.0
        %1000 = vmatpush.msra.mxu0 0.0
        %1001 = vmatpush.msra.mxu0 0.0
        %1002 = vmatpush.msra.mxu0 0.0
        %1003 = vmatpush.msra.mxu0 0.0
        %1004 = vmatpush.msra.mxu0 0.0
        %1005 = vmatpush.msra.mxu0 0.0
        %1006 = vmatpush.msra.mxu0 %v989
        %1007 = vmatpush.msra.mxu0 %v988
        %1008 = vmatpush.msra.mxu0 %v987
        %1009 = vmatpush.msra.mxu0 %v986
        %1010 = vmatmul.f32.gmra.mxu0 %v992
        %v1011 = vpop.f32.mrf.mxu0
        %v1012 = vadd.f32 %v990, %v1011
        %1013 = vdwg.mxu0
        %vm1014 = vcmask 73728
        %1015 = vst.msk [vmem:[%s324] sm:$0x1] %vm1014, %v1012
        %s1016 = sand.u32 %s225, 1
        %s1017 = scalar_lea.sflag [#allocation7], %s1016
        %s1018 = sand.u32 %s225, 1
        %s1019 = scalar_lea.vmem [#allocation6], %s1018
        // Predicated region
        $region57: #{net_forward.1} parent=55 // pred_check
          %p1020 = pneg %p235
        $region58: #{net_forward.1} parent=55 // pred_check_branch
          %1022 = sbr.rel (%p1020) target = $region60
        $region59: #{net_forward.1} parent=55 // pred_region
          %1024 = vsyncadd %s1017, 0
          %s1025 = scalar_lea.hbm %s9, %s23
          %s1027 = sshll.u32 %s1019, 4
          %s1028 = int_to_ptr.vmem [resolvable:$true] %s1027
          %s1029 = sshll.u32 %s1025, 4
          %s1030 = int_to_ptr.hbm [resolvable:$true] %s1029
          %1032 = dma.vmem_to_hbm [thread:$0]  %s1028, 16, %s1030, %s1017
        $region60: #{net_forward.1} parent=55 // pred_fallthru
          _
      $region56: #{net_forward.1} parent=5 // pred_fallthru
        _
      %p1033 = scmp.le.s32.totalorder 2, %s18
      // Predicated region
      $region61: #{net_forward.1} parent=5 // pred_check
        %p1034 = pneg %p1033
      $region62: #{net_forward.1} parent=5 // pred_check_branch
        %1036 = sbr.rel (%p1034) target = $region64
      $region63: #{net_forward.1} parent=5 // pred_region
        %s1037 = ssub.s32 %s18, 2
        // Predicated region
        $region65: #{net_forward.1} parent=63 // pred_check
          %p1038 = pneg %p241
        $region66: #{net_forward.1} parent=63 // pred_check_branch
          %1040 = sbr.rel (%p1038) target = $region68
        $region67: #{net_forward.1} parent=63 // pred_region
          %s1041 = sand.u32 %s226, 1
          %s1042 = scalar_lea.sflag [#allocation7], %s1041
          %s1043 = sand.u32 %s226, 1
          %s1044 = scalar_lea.vmem [#allocation6], %s1043
          %1046 = dma.done %s1042, 16
        $region68: #{net_forward.1} parent=63 // pred_fallthru
          _
      $region64: #{net_forward.1} parent=5 // pred_fallthru
        _
    $region6: #{net_forward.1} parent=1 // loop_footer
      %s22 = sadd.s32 1, %s18
    $region7: #{net_forward.1} parent=1 // loop_footer_branch
      %17 = sbr.rel target = $region3
    $region8: #{net_forward.1} parent=1 // loop_exit
      _
    %1047 = vsyncpa [#allocation7], 1
    %s1048 = scalar_lea.sflag [#allocation7], 1
    %1049 = vsyncpa %s1048, 1

</llo_original>
